<compile_context>
chip_gen: v7x
topology: tpu7x:2x2x1
jax: 0.10.0
libtpu: 0.0.40
codegen_flags: <defaults>
</compile_context>

<pallas_src>
import jax
import jax.numpy as jnp
from jax.experimental import pallas as pl
from jax.experimental.pallas import tpu as pltpu

EPS = 1e-5


def layerblock_kernel(x_ref, w1_ref, g1_ref, b1_ref, w2_ref, g2_ref, b2_ref,
                      m_ref, o_ref, pad_ref):
    # x_ref:    (N, H, W*C)         input, lane-dense along W*C
    # w*_ref:   (3*(W+2)*C, W*C)    block-Toeplitz expanded conv weights
    # g*/b*_ref:(1, W*C)            BN gamma/beta, per-channel, tiled over W
    # m_ref:    (W*C, W*C)          channel-averaging matrix (1/R on matching chans)
    # o_ref:    (N*H, W*C)          output, lane-dense
    # pad_ref:  (N, H+2, (W+2)*C)   shared zero-halo padded VMEM scratch
    N, H, WC = x_ref.shape
    Hp = pad_ref.shape[1]
    WpC = pad_ref.shape[2]
    C = (WpC - WC) // 2
    NH = N * H

    # ---- zero only the 1-pixel halo of the shared scratch (interior is
    #      always overwritten before being read) ----
    pad_ref[:, 0:1, :] = jnp.zeros((N, 1, WpC), jnp.float32)
    pad_ref[:, Hp - 1:Hp, :] = jnp.zeros((N, 1, WpC), jnp.float32)
    pad_ref[:, :, 0:C] = jnp.zeros((N, Hp, C), jnp.float32)
    pad_ref[:, :, WpC - C:WpC] = jnp.zeros((N, Hp, C), jnp.float32)

    x = x_ref[...]                                   # (N, H, W*C)
    pad_ref[:, 1:1 + H, C:C + WC] = x                # place input in interior

    def conv3x3(w_ref):
        # One MXU contraction: LHS = three vertically shifted padded row slabs
        # concatenated along lanes (K = 3*(W+2)*C); the horizontal taps are
        # already folded into the block-Toeplitz weights -> lane-dense output.
        rows = [pad_ref[:, kh:kh + H, :].reshape(NH, WpC) for kh in range(3)]
        lhs = jnp.concatenate(rows, axis=-1)          # (N*H, 3*(W+2)*C)
        return jnp.dot(lhs, w_ref[...],
                       preferred_element_type=jnp.float32)   # (N*H, W*C)

    def batchnorm(y, g_ref, b_ref):
        # Training-mode BN: biased batch stats over (N, H, W) per channel,
        # computed and applied entirely in the lane-dense (N*H, W*C) layout.
        col_sum = jnp.sum(y, axis=0, keepdims=True)            # (1, W*C)
        mean_t = jnp.dot(col_sum, m_ref[...],                  # per-channel mean,
                         preferred_element_type=jnp.float32)   # tiled across lanes
        d = y - mean_t
        col_ss = jnp.sum(d * d, axis=0, keepdims=True)         # two-pass variance
        var_t = jnp.dot(col_ss, m_ref[...],
                        preferred_element_type=jnp.float32)
        return d * jax.lax.rsqrt(var_t + EPS) * g_ref[...] + b_ref[...]

    # ---- conv1 -> BN -> ReLU ----
    h1 = jnp.maximum(batchnorm(conv3x3(w1_ref), g1_ref, b1_ref), 0.0)

    # reuse the padded scratch: overwrite interior with h1 (halo is still zero)
    pad_ref[:, 1:1 + H, C:C + WC] = h1.reshape(N, H, WC)

    # ---- conv2 -> BN, residual add (featureTransformer is None) ----
    h2 = batchnorm(conv3x3(w2_ref), g2_ref, b2_ref)
    o_ref[...] = (h2 + x.reshape(NH, WC)).astype(o_ref.dtype)


def _expand_conv_weight(w, W):
    """(3, 3, Cin, Cout) HWIO -> block-Toeplitz (3*(W+2)*Cin, W*Cout) so a full
    3x3 / stride-1 / pad-1 conv row becomes a single matmul against the three
    padded input row slabs, producing a lane-dense (W*Cout) output row."""
    kh, kw, cin, cout = w.shape
    Wp = W + 2
    cols = []
    for wo in range(W):
        blk = jnp.zeros((kh, Wp, cin, cout), w.dtype)
        blk = blk.at[:, wo:wo + kw, :, :].set(w)      # taps at padded cols wo..wo+2
        cols.append(blk)
    rhs = jnp.stack(cols, axis=3)                     # (3, Wp, Cin, W, Cout)
    return rhs.reshape(kh * Wp * cin, W * cout)


def layer_block(x, w1, g1, b1, w2, g2, b2):
    """x: [N, H, W, Cin] f32 (NHWC); w*: [3, 3, Cin, Cout]; g*/b*: [Cout]."""
    N, H, W, Cin = x.shape
    Cout = w1.shape[-1]
    assert Cin == Cout, "residual needs Cin == Cout when featureTransformer is None"
    WC = W * Cout
    R = N * H * W

    x2d = x.reshape(N, H, W * Cin)
    w1e = _expand_conv_weight(w1, W)
    w2e = _expand_conv_weight(w2, W)
    tile_c = lambda v: jnp.tile(v, W).reshape(1, WC)          # per-channel -> per-lane
    # (row-sums) @ m_avg == per-channel mean, already tiled across the W groups.
    m_avg = jnp.tile(jnp.eye(Cout, dtype=jnp.float32), (W, W)) / R

    vmem = pl.BlockSpec(memory_space=pltpu.MemorySpace.VMEM)
    out2d = pl.pallas_call(
        layerblock_kernel,
        out_shape=jax.ShapeDtypeStruct((N * H, WC), jnp.float32),
        in_specs=[vmem] * 8,
        out_specs=vmem,
        scratch_shapes=[pltpu.VMEM((N, H + 2, (W + 2) * Cout), jnp.float32)],
        compiler_params=pltpu.CompilerParams(vmem_limit_bytes=32 * 1024 * 1024),
    )(x2d, w1e, tile_c(g1), tile_c(b1), w2e, tile_c(g2), tile_c(b2), m_avg)
    return out2d.reshape(N, H, W, Cout)


def _reference(x, w1, g1, b1, w2, g2, b2):
    """Pure-JAX reference matching the PyTorch forward (NHWC)."""
    def conv_bn(h, w, g, b):
        y = jax.lax.conv_general_dilated(
            h, w, window_strides=(1, 1), padding="SAME",
            dimension_numbers=("NHWC", "HWIO", "NHWC"))
        m = jnp.mean(y, axis=(0, 1, 2), keepdims=True)
        v = jnp.mean((y - m) ** 2, axis=(0, 1, 2), keepdims=True)
        return (y - m) * jax.lax.rsqrt(v + EPS) * g + b
    out = jnp.maximum(conv_bn(x, w1, g1, b1), 0.0)
    out = conv_bn(out, w2, g2, b2)
    return out + x


if __name__ == "__main__":
    key = jax.random.PRNGKey(0)
    N, H, W, C = 2, 16, 16, 8  # inChannels == outChannels, stride=1; W*C = 128
    ks = jax.random.split(key, 7)
    x = jax.random.normal(ks[0], (N, H, W, C), jnp.float32)
    w1 = jax.random.normal(ks[1], (3, 3, C, C), jnp.float32) * 0.1
    w2 = jax.random.normal(ks[2], (3, 3, C, C), jnp.float32) * 0.1
    g1 = 1.0 + 0.1 * jax.random.normal(ks[3], (C,), jnp.float32)
    b1 = 0.1 * jax.random.normal(ks[4], (C,), jnp.float32)
    g2 = 1.0 + 0.1 * jax.random.normal(ks[5], (C,), jnp.float32)
    b2 = 0.1 * jax.random.normal(ks[6], (C,), jnp.float32)

    out = layer_block(x, w1, g1, b1, w2, g2, b2)
    jax.block_until_ready(out)

    ref = _reference(x, w1, g1, b1, w2, g2, b2)
    assert out.shape == (N, H, W, C) and out.dtype == jnp.float32
    err = float(jnp.max(jnp.abs(out - ref)))
    assert err < 1e-4, f"max abs err = {err}"
    print("KERNEL_OK")
</pallas_src>

<mosaic_0001>
module attributes {stable_mosaic.version = 11 : i64} {
  func.func @layerblock_kernel(%arg0: memref<2x16x128xf32, #tpu.memory_space<vmem>>, %arg1: memref<432x128xf32, #tpu.memory_space<vmem>>, %arg2: memref<1x128xf32, #tpu.memory_space<vmem>>, %arg3: memref<1x128xf32, #tpu.memory_space<vmem>>, %arg4: memref<432x128xf32, #tpu.memory_space<vmem>>, %arg5: memref<1x128xf32, #tpu.memory_space<vmem>>, %arg6: memref<1x128xf32, #tpu.memory_space<vmem>>, %arg7: memref<128x128xf32, #tpu.memory_space<vmem>>, %arg8: memref<32x128xf32, #tpu.memory_space<vmem>>, %arg9: memref<2x18x144xf32, #tpu.memory_space<vmem>>) attributes {dimension_semantics = [], scalar_prefetch = 0 : i64, scratch_operands = 1 : i64, tpu.core_type = #tpu.core_type<tc>} {
    %cst = arith.constant 0.000000e+00 : f32
    %0 = vector.broadcast %cst : f32 to vector<2x1x144xf32>
    %c0 = arith.constant 0 : index
    %c0_0 = arith.constant 0 : index
    %c0_1 = arith.constant 0 : index
    %1 = vector.load %arg9[%c0, %c0_0, %c0_1] : memref<2x18x144xf32, #tpu.memory_space<vmem>>, vector<2x1x144xf32>
    tpu.vector_store %arg9[%c0, %c0_0, %c0_1], %0 {strides = array<i32>} : memref<2x18x144xf32, #tpu.memory_space<vmem>>, vector<2x1x144xf32>,
    %cst_2 = arith.constant 0.000000e+00 : f32
    %2 = vector.broadcast %cst_2 : f32 to vector<2x1x144xf32>
    %c0_3 = arith.constant 0 : index
    %c17 = arith.constant 17 : index
    %c0_4 = arith.constant 0 : index
    %3 = vector.load %arg9[%c0_3, %c17, %c0_4] : memref<2x18x144xf32, #tpu.memory_space<vmem>>, vector<2x1x144xf32>
    tpu.vector_store %arg9[%c0_3, %c17, %c0_4], %2 {strides = array<i32>} : memref<2x18x144xf32, #tpu.memory_space<vmem>>, vector<2x1x144xf32>,
    %cst_5 = arith.constant 0.000000e+00 : f32
    %4 = vector.broadcast %cst_5 : f32 to vector<2x18x8xf32>
    %c0_6 = arith.constant 0 : index
    %c0_7 = arith.constant 0 : index
    %c0_8 = arith.constant 0 : index
    %5 = vector.load %arg9[%c0_6, %c0_7, %c0_8] : memref<2x18x144xf32, #tpu.memory_space<vmem>>, vector<2x18x8xf32>
    tpu.vector_store %arg9[%c0_6, %c0_7, %c0_8], %4 {strides = array<i32>} : memref<2x18x144xf32, #tpu.memory_space<vmem>>, vector<2x18x8xf32>,
    %cst_9 = arith.constant 0.000000e+00 : f32
    %6 = vector.broadcast %cst_9 : f32 to vector<2x18x8xf32>
    %c0_10 = arith.constant 0 : index
    %c0_11 = arith.constant 0 : index
    %c136 = arith.constant 136 : index
    %7 = vector.load %arg9[%c0_10, %c0_11, %c136] : memref<2x18x144xf32, #tpu.memory_space<vmem>>, vector<2x18x8xf32>
    tpu.vector_store %arg9[%c0_10, %c0_11, %c136], %6 {strides = array<i32>} : memref<2x18x144xf32, #tpu.memory_space<vmem>>, vector<2x18x8xf32>,
    %c0_12 = arith.constant 0 : index
    %c0_13 = arith.constant 0 : index
    %c0_14 = arith.constant 0 : index
    %8 = vector.load %arg0[%c0_12, %c0_13, %c0_14] : memref<2x16x128xf32, #tpu.memory_space<vmem>>, vector<2x16x128xf32>
    %c0_15 = arith.constant 0 : index
    %c1 = arith.constant 1 : index
    %c8 = arith.constant 8 : index
    %9 = vector.load %arg9[%c0_15, %c1, %c8] : memref<2x18x144xf32, #tpu.memory_space<vmem>>, vector<2x16x128xf32>
    tpu.vector_store %arg9[%c0_15, %c1, %c8], %8 {strides = array<i32>} : memref<2x18x144xf32, #tpu.memory_space<vmem>>, vector<2x16x128xf32>,
    %c0_16 = arith.constant 0 : index
    %c0_17 = arith.constant 0 : index
    %c0_18 = arith.constant 0 : index
    %10 = vector.load %arg9[%c0_16, %c0_17, %c0_18] : memref<2x18x144xf32, #tpu.memory_space<vmem>>, vector<2x16x144xf32>
    %11 = vector.shape_cast %10 : vector<2x16x144xf32> to vector<32x144xf32>
    %c0_19 = arith.constant 0 : index
    %c1_20 = arith.constant 1 : index
    %c0_21 = arith.constant 0 : index
    %12 = vector.load %arg9[%c0_19, %c1_20, %c0_21] : memref<2x18x144xf32, #tpu.memory_space<vmem>>, vector<2x16x144xf32>
    %13 = vector.shape_cast %12 : vector<2x16x144xf32> to vector<32x144xf32>
    %c0_22 = arith.constant 0 : index
    %c2 = arith.constant 2 : index
    %c0_23 = arith.constant 0 : index
    %14 = vector.load %arg9[%c0_22, %c2, %c0_23] : memref<2x18x144xf32, #tpu.memory_space<vmem>>, vector<2x16x144xf32>
    %15 = vector.shape_cast %14 : vector<2x16x144xf32> to vector<32x144xf32>
    %16 = tpu.concatenate %11, %13, %15 in 1 : vector<32x144xf32>, vector<32x144xf32>, vector<32x144xf32> -> vector<32x432xf32>
    %c0_24 = arith.constant 0 : index
    %c0_25 = arith.constant 0 : index
    %17 = vector.load %arg1[%c0_24, %c0_25] : memref<432x128xf32, #tpu.memory_space<vmem>>, vector<432x128xf32>
    %cst_26 = arith.constant dense<0.000000e+00> : vector<32x128xf32>
    %18 = tpu.matmul %16, %17, %cst_26 {dimension_numbers = #tpu.dot_dimension_numbers<[1], [0], [0], [1], [0, 0, 1, 1], [], []>} : vector<32x432xf32>, vector<432x128xf32>, vector<32x128xf32> -> vector<32x128xf32>
    %cst_27 = arith.constant dense<0.000000e+00> : vector<128xf32>
    %19 = vector.multi_reduction <add>, %18, %cst_27 [0] : vector<32x128xf32> to vector<128xf32>
    %20 = vector.shape_cast %19 : vector<128xf32> to vector<1x128xf32>
    %c0_28 = arith.constant 0 : index
    %c0_29 = arith.constant 0 : index
    %21 = vector.load %arg7[%c0_28, %c0_29] : memref<128x128xf32, #tpu.memory_space<vmem>>, vector<128x128xf32>
    %cst_30 = arith.constant dense<0.000000e+00> : vector<1x128xf32>
    %22 = tpu.matmul %20, %21, %cst_30 {dimension_numbers = #tpu.dot_dimension_numbers<[1], [0], [0], [1], [0, 0, 1, 1], [], []>} : vector<1x128xf32>, vector<128x128xf32>, vector<1x128xf32> -> vector<1x128xf32>
    %23 = vector.broadcast %22 : vector<1x128xf32> to vector<32x128xf32>
    %24 = arith.subf %18, %23 : vector<32x128xf32>
    %25 = arith.mulf %24, %24 : vector<32x128xf32>
    %cst_31 = arith.constant dense<0.000000e+00> : vector<128xf32>
    %26 = vector.multi_reduction <add>, %25, %cst_31 [0] : vector<32x128xf32> to vector<128xf32>
    %27 = vector.shape_cast %26 : vector<128xf32> to vector<1x128xf32>
    %c0_32 = arith.constant 0 : index
    %c0_33 = arith.constant 0 : index
    %28 = vector.load %arg7[%c0_32, %c0_33] : memref<128x128xf32, #tpu.memory_space<vmem>>, vector<128x128xf32>
    %cst_34 = arith.constant dense<0.000000e+00> : vector<1x128xf32>
    %29 = tpu.matmul %27, %28, %cst_34 {dimension_numbers = #tpu.dot_dimension_numbers<[1], [0], [0], [1], [0, 0, 1, 1], [], []>} : vector<1x128xf32>, vector<128x128xf32>, vector<1x128xf32> -> vector<1x128xf32>
    %cst_35 = arith.constant 9.99999974E-6 : f32
    %30 = vector.broadcast %cst_35 : f32 to vector<1x128xf32>
    %31 = arith.addf %29, %30 : vector<1x128xf32>
    %32 = math.rsqrt %31 : vector<1x128xf32>
    %33 = vector.broadcast %32 : vector<1x128xf32> to vector<32x128xf32>
    %34 = arith.mulf %24, %33 : vector<32x128xf32>
    %c0_36 = arith.constant 0 : index
    %c0_37 = arith.constant 0 : index
    %35 = vector.load %arg2[%c0_36, %c0_37] : memref<1x128xf32, #tpu.memory_space<vmem>>, vector<1x128xf32>
    %36 = vector.broadcast %35 : vector<1x128xf32> to vector<32x128xf32>
    %37 = arith.mulf %34, %36 : vector<32x128xf32>
    %c0_38 = arith.constant 0 : index
    %c0_39 = arith.constant 0 : index
    %38 = vector.load %arg3[%c0_38, %c0_39] : memref<1x128xf32, #tpu.memory_space<vmem>>, vector<1x128xf32>
    %39 = vector.broadcast %38 : vector<1x128xf32> to vector<32x128xf32>
    %40 = arith.addf %37, %39 : vector<32x128xf32>
    %cst_40 = arith.constant 0.000000e+00 : f32
    %41 = vector.broadcast %cst_40 : f32 to vector<32x128xf32>
    %42 = arith.maximumf %40, %41 : vector<32x128xf32>
    %43 = vector.shape_cast %42 : vector<32x128xf32> to vector<2x16x128xf32>
    %c0_41 = arith.constant 0 : index
    %c1_42 = arith.constant 1 : index
    %c8_43 = arith.constant 8 : index
    %44 = vector.load %arg9[%c0_41, %c1_42, %c8_43] : memref<2x18x144xf32, #tpu.memory_space<vmem>>, vector<2x16x128xf32>
    tpu.vector_store %arg9[%c0_41, %c1_42, %c8_43], %43 {strides = array<i32>} : memref<2x18x144xf32, #tpu.memory_space<vmem>>, vector<2x16x128xf32>,
    %c0_44 = arith.constant 0 : index
    %c0_45 = arith.constant 0 : index
    %c0_46 = arith.constant 0 : index
    %45 = vector.load %arg9[%c0_44, %c0_45, %c0_46] : memref<2x18x144xf32, #tpu.memory_space<vmem>>, vector<2x16x144xf32>
    %46 = vector.shape_cast %45 : vector<2x16x144xf32> to vector<32x144xf32>
    %c0_47 = arith.constant 0 : index
    %c1_48 = arith.constant 1 : index
    %c0_49 = arith.constant 0 : index
    %47 = vector.load %arg9[%c0_47, %c1_48, %c0_49] : memref<2x18x144xf32, #tpu.memory_space<vmem>>, vector<2x16x144xf32>
    %48 = vector.shape_cast %47 : vector<2x16x144xf32> to vector<32x144xf32>
    %c0_50 = arith.constant 0 : index
    %c2_51 = arith.constant 2 : index
    %c0_52 = arith.constant 0 : index
    %49 = vector.load %arg9[%c0_50, %c2_51, %c0_52] : memref<2x18x144xf32, #tpu.memory_space<vmem>>, vector<2x16x144xf32>
    %50 = vector.shape_cast %49 : vector<2x16x144xf32> to vector<32x144xf32>
    %51 = tpu.concatenate %46, %48, %50 in 1 : vector<32x144xf32>, vector<32x144xf32>, vector<32x144xf32> -> vector<32x432xf32>
    %c0_53 = arith.constant 0 : index
    %c0_54 = arith.constant 0 : index
    %52 = vector.load %arg4[%c0_53, %c0_54] : memref<432x128xf32, #tpu.memory_space<vmem>>, vector<432x128xf32>
    %cst_55 = arith.constant dense<0.000000e+00> : vector<32x128xf32>
    %53 = tpu.matmul %51, %52, %cst_55 {dimension_numbers = #tpu.dot_dimension_numbers<[1], [0], [0], [1], [0, 0, 1, 1], [], []>} : vector<32x432xf32>, vector<432x128xf32>, vector<32x128xf32> -> vector<32x128xf32>
    %cst_56 = arith.constant dense<0.000000e+00> : vector<128xf32>
    %54 = vector.multi_reduction <add>, %53, %cst_56 [0] : vector<32x128xf32> to vector<128xf32>
    %55 = vector.shape_cast %54 : vector<128xf32> to vector<1x128xf32>
    %c0_57 = arith.constant 0 : index
    %c0_58 = arith.constant 0 : index
    %56 = vector.load %arg7[%c0_57, %c0_58] : memref<128x128xf32, #tpu.memory_space<vmem>>, vector<128x128xf32>
    %cst_59 = arith.constant dense<0.000000e+00> : vector<1x128xf32>
    %57 = tpu.matmul %55, %56, %cst_59 {dimension_numbers = #tpu.dot_dimension_numbers<[1], [0], [0], [1], [0, 0, 1, 1], [], []>} : vector<1x128xf32>, vector<128x128xf32>, vector<1x128xf32> -> vector<1x128xf32>
    %58 = vector.broadcast %57 : vector<1x128xf32> to vector<32x128xf32>
    %59 = arith.subf %53, %58 : vector<32x128xf32>
    %60 = arith.mulf %59, %59 : vector<32x128xf32>
    %cst_60 = arith.constant dense<0.000000e+00> : vector<128xf32>
    %61 = vector.multi_reduction <add>, %60, %cst_60 [0] : vector<32x128xf32> to vector<128xf32>
    %62 = vector.shape_cast %61 : vector<128xf32> to vector<1x128xf32>
    %c0_61 = arith.constant 0 : index
    %c0_62 = arith.constant 0 : index
    %63 = vector.load %arg7[%c0_61, %c0_62] : memref<128x128xf32, #tpu.memory_space<vmem>>, vector<128x128xf32>
    %cst_63 = arith.constant dense<0.000000e+00> : vector<1x128xf32>
    %64 = tpu.matmul %62, %63, %cst_63 {dimension_numbers = #tpu.dot_dimension_numbers<[1], [0], [0], [1], [0, 0, 1, 1], [], []>} : vector<1x128xf32>, vector<128x128xf32>, vector<1x128xf32> -> vector<1x128xf32>
    %cst_64 = arith.constant 9.99999974E-6 : f32
    %65 = vector.broadcast %cst_64 : f32 to vector<1x128xf32>
    %66 = arith.addf %64, %65 : vector<1x128xf32>
    %67 = math.rsqrt %66 : vector<1x128xf32>
    %68 = vector.broadcast %67 : vector<1x128xf32> to vector<32x128xf32>
    %69 = arith.mulf %59, %68 : vector<32x128xf32>
    %c0_65 = arith.constant 0 : index
    %c0_66 = arith.constant 0 : index
    %70 = vector.load %arg5[%c0_65, %c0_66] : memref<1x128xf32, #tpu.memory_space<vmem>>, vector<1x128xf32>
    %71 = vector.broadcast %70 : vector<1x128xf32> to vector<32x128xf32>
    %72 = arith.mulf %69, %71 : vector<32x128xf32>
    %c0_67 = arith.constant 0 : index
    %c0_68 = arith.constant 0 : index
    %73 = vector.load %arg6[%c0_67, %c0_68] : memref<1x128xf32, #tpu.memory_space<vmem>>, vector<1x128xf32>
    %74 = vector.broadcast %73 : vector<1x128xf32> to vector<32x128xf32>
    %75 = arith.addf %72, %74 : vector<32x128xf32>
    %76 = vector.shape_cast %8 : vector<2x16x128xf32> to vector<32x128xf32>
    %77 = arith.addf %75, %76 : vector<32x128xf32>
    %c0_69 = arith.constant 0 : index
    %c0_70 = arith.constant 0 : index
    %78 = vector.load %arg8[%c0_69, %c0_70] : memref<32x128xf32, #tpu.memory_space<vmem>>, vector<32x128xf32>
    tpu.vector_store %arg8[%c0_69, %c0_70], %77 {strides = array<i32>} : memref<32x128xf32, #tpu.memory_space<vmem>>, vector<32x128xf32>,
    return
  }
}

</mosaic_0001>

<llo_original>
// kernel: tpu_custom_call.1
$region0: #{tpu_custom_call.1}
  #allocation0 [shape = 'u32[]', space=smem, size = 0x4, offset = 0x4, fixed_abs, tag = 'smem constant byte address 0x4 - core index']
  #allocation1 [shape = 'u32[144,128]{1,0:T(1,128)}', space=vmem, size = 0x12000, scoped, tag = 'internal scratch']
  #allocation2 [shape = 'f32[2,18,144]{2,1,0:T(8,128)}', space=vmem, size = 0xc000, scoped, tag = 'scratch operand']
  %s0 = inlined_call_operand.hbm [shape: f32[2,16,128], index: 0, kind: input, shape index: {}]
  %s1 = inlined_call_operand.hbm [shape: f32[432,128], index: 1, kind: input, shape index: {}]
  %s2 = inlined_call_operand.vmem [shape: f32[1,128], index: 2, kind: input, shape index: {}]
  %s3 = inlined_call_operand.vmem [shape: f32[1,128], index: 3, kind: input, shape index: {}]
  %s4 = inlined_call_operand.hbm [shape: f32[432,128], index: 4, kind: input, shape index: {}]
  %s5 = inlined_call_operand.vmem [shape: f32[1,128], index: 5, kind: input, shape index: {}]
  %s6 = inlined_call_operand.vmem [shape: f32[1,128], index: 6, kind: input, shape index: {}]
  %s7 = inlined_call_operand.hbm [shape: f32[128,128], index: 7, kind: input, shape index: {}]
  %s8 = inlined_call_operand.hbm [shape: f32[32,128], index: 8, kind: output, shape index: {}]
  %s9 = sld [smem:[#allocation0]]
  $region58: #{tpu_custom_call.1} parent=0
    _
  %s11 = ssub.s32 1, %s9
  %s12 = scalar_select 0, %s11, %s9
  $region1: #{tpu_custom_call.1} parent=0
    #allocation3 [shape = 'u8[16384]{0}', space=vmem, size = 0x4000, scoped, tag = 'input window, operand 0, single buffered']
    #allocation4 [shape = 's32[1]{0}', space=sflag, size = 0x4, scoped, tag = 'scoped memory for tpu_custom_call.1']
    #allocation5 [shape = 's32[1]{0}', space=sflag, size = 0x4, scoped, tag = 'scoped memory for tpu_custom_call.1']
    #allocation6 [shape = 'u8[221184]{0}', space=vmem, size = 0x36000, scoped, tag = 'input window, operand 1, single buffered']
    #allocation7 [shape = 's32[1]{0}', space=sflag, size = 0x4, scoped, tag = 'scoped memory for tpu_custom_call.1']
    #allocation8 [shape = 'u8[221184]{0}', space=vmem, size = 0x36000, scoped, tag = 'input window, operand 4, single buffered']
    #allocation9 [shape = 'u8[65536]{0}', space=vmem, size = 0x10000, scoped, tag = 'input window, operand 7, single buffered']
    #allocation10 [shape = 's32[1]{0}', space=sflag, size = 0x4, scoped, tag = 'scoped memory for tpu_custom_call.1']
    #allocation11 [shape = 'u8[16384]{0}', space=vmem, size = 0x4000, scoped, tag = 'output window, operand 0, single buffered']
    %13 = vsyncpa [#allocation4], 0
    %14 = vsyncpa [#allocation7], 0
    %15 = vsyncpa [#allocation10], 0
    %16 = vsyncpa [#allocation5], 0
    // Predicated region
    $region2: #{tpu_custom_call.1} parent=1 // pred_check
      _
    $region3: #{tpu_custom_call.1} parent=1 // pred_check_branch
      %18 = sbr.rel (0) target = $region5
    $region4: #{tpu_custom_call.1} parent=1 // pred_region
      %s20 = ssub.s32 512, 512
      %21 = vsyncadd [#allocation4], %s20
      %s22 = sshll.u32 [#allocation3], 4
      %s23 = int_to_ptr.vmem [resolvable:$true] %s22
      %28 = dma.hbm_to_vmem [thread:$0]  %s0, 512, %s23, [#allocation4], 128, 128, 8
    $region5: #{tpu_custom_call.1} parent=1 // pred_fallthru
      _
    // Predicated region
    $region6: #{tpu_custom_call.1} parent=1 // pred_check
      _
    $region7: #{tpu_custom_call.1} parent=1 // pred_check_branch
      %30 = sbr.rel (0) target = $region9
    $region8: #{tpu_custom_call.1} parent=1 // pred_region
      %s32 = ssub.s32 6912, 6912
      %33 = vsyncadd [#allocation7], %s32
      %s34 = sshll.u32 [#allocation6], 4
      %s35 = int_to_ptr.vmem [resolvable:$true] %s34
      %40 = dma.hbm_to_vmem [thread:$0]  %s1, 6912, %s35, [#allocation7], 128, 128, 8
    $region9: #{tpu_custom_call.1} parent=1 // pred_fallthru
      _
    // Predicated region
    $region10: #{tpu_custom_call.1} parent=1 // pred_check
      _
    $region11: #{tpu_custom_call.1} parent=1 // pred_check_branch
      %42 = sbr.rel (0) target = $region13
    $region12: #{tpu_custom_call.1} parent=1 // pred_region
      _
    $region13: #{tpu_custom_call.1} parent=1 // pred_fallthru
      _
    // Predicated region
    $region14: #{tpu_custom_call.1} parent=1 // pred_check
      _
    $region15: #{tpu_custom_call.1} parent=1 // pred_check_branch
      %44 = sbr.rel (0) target = $region17
    $region16: #{tpu_custom_call.1} parent=1 // pred_region
      _
    $region17: #{tpu_custom_call.1} parent=1 // pred_fallthru
      _
    // Predicated region
    $region18: #{tpu_custom_call.1} parent=1 // pred_check
      _
    $region19: #{tpu_custom_call.1} parent=1 // pred_check_branch
      %46 = sbr.rel (0) target = $region21
    $region20: #{tpu_custom_call.1} parent=1 // pred_region
      %s48 = ssub.s32 6912, 6912
      %49 = vsyncadd [#allocation7], %s48
      %s50 = sshll.u32 [#allocation8], 4
      %s51 = int_to_ptr.vmem [resolvable:$true] %s50
      %56 = dma.hbm_to_vmem [thread:$0]  %s4, 6912, %s51, [#allocation7], 128, 128, 8
    $region21: #{tpu_custom_call.1} parent=1 // pred_fallthru
      _
    // Predicated region
    $region22: #{tpu_custom_call.1} parent=1 // pred_check
      _
    $region23: #{tpu_custom_call.1} parent=1 // pred_check_branch
      %58 = sbr.rel (0) target = $region25
    $region24: #{tpu_custom_call.1} parent=1 // pred_region
      _
    $region25: #{tpu_custom_call.1} parent=1 // pred_fallthru
      _
    // Predicated region
    $region26: #{tpu_custom_call.1} parent=1 // pred_check
      _
    $region27: #{tpu_custom_call.1} parent=1 // pred_check_branch
      %60 = sbr.rel (0) target = $region29
    $region28: #{tpu_custom_call.1} parent=1 // pred_region
      _
    $region29: #{tpu_custom_call.1} parent=1 // pred_fallthru
      _
    // Predicated region
    $region30: #{tpu_custom_call.1} parent=1 // pred_check
      _
    $region31: #{tpu_custom_call.1} parent=1 // pred_check_branch
      %62 = sbr.rel (0) target = $region33
    $region32: #{tpu_custom_call.1} parent=1 // pred_region
      %s64 = ssub.s32 2048, 2048
      %65 = vsyncadd [#allocation10], %s64
      %s66 = sshll.u32 [#allocation9], 4
      %s67 = int_to_ptr.vmem [resolvable:$true] %s66
      %72 = dma.hbm_to_vmem [thread:$0]  %s7, 2048, %s67, [#allocation10], 128, 128, 8
    $region33: #{tpu_custom_call.1} parent=1 // pred_fallthru
      _
    // Predicated region
    $region34: #{tpu_custom_call.1} parent=1 // pred_check
      _
    $region35: #{tpu_custom_call.1} parent=1 // pred_check_branch
      %74 = sbr.rel (0) target = $region37
    $region36: #{tpu_custom_call.1} parent=1 // pred_region
      %75 = dma.done [#allocation4], 512
    $region37: #{tpu_custom_call.1} parent=1 // pred_fallthru
      _
    // Predicated region
    $region38: #{tpu_custom_call.1} parent=1 // pred_check
      _
    $region39: #{tpu_custom_call.1} parent=1 // pred_check_branch
      %77 = sbr.rel (0) target = $region41
    $region40: #{tpu_custom_call.1} parent=1 // pred_region
      %78 = dma.done [#allocation7], 6912
    $region41: #{tpu_custom_call.1} parent=1 // pred_fallthru
      _
    // Predicated region
    $region42: #{tpu_custom_call.1} parent=1 // pred_check
      _
    $region43: #{tpu_custom_call.1} parent=1 // pred_check_branch
      %80 = sbr.rel (0) target = $region45
    $region44: #{tpu_custom_call.1} parent=1 // pred_region
      %81 = dma.done [#allocation7], 6912
    $region45: #{tpu_custom_call.1} parent=1 // pred_fallthru
      _
    // Predicated region
    $region46: #{tpu_custom_call.1} parent=1 // pred_check
      _
    $region47: #{tpu_custom_call.1} parent=1 // pred_check_branch
      %83 = sbr.rel (0) target = $region49
    $region48: #{tpu_custom_call.1} parent=1 // pred_region
      %84 = dma.done [#allocation10], 2048
    $region49: #{tpu_custom_call.1} parent=1 // pred_fallthru
      _
    %v85 = vlaneseq
    %vm86 = vcmp.ge.s32.totalorder %v85, 0
    %vm87 = vcmp.lt.s32.totalorder %v85, 144
    %vm88 = vmand %vm86, %vm87
    %89 = vst.msk [vmem:[#allocation2] ss:$8 sm:$0x3] %vm88, 0.0
    %90 = vst.msk [vmem:[#allocation2] ss:$8 sm:$0x0] %vm88, 0.0
    %s91 = scalar_lea.vmem [#allocation2], 48
    %92 = vst.msk [vmem:[%s91] ss:$8 sm:$0x3] %vm88, 0.0
    %93 = vst.msk [vmem:[%s91] ss:$8 sm:$0x0] %vm88, 0.0
    %s94 = scalar_lea.vmem [#allocation2], 33
    %95 = vst.msk [vmem:[%s94] ss:$8 sm:$0x3] %vm88, 0.0
    %96 = vst.msk [vmem:[%s94] ss:$8 sm:$0x0] %vm88, 0.0
    %s97 = scalar_lea.vmem [#allocation2], 81
    %98 = vst.msk [vmem:[%s97] ss:$8 sm:$0x3] %vm88, 0.0
    %99 = vst.msk [vmem:[%s97] ss:$8 sm:$0x0] %vm88, 0.0
    %vm100 = vcmask 64512
    %101 = vst.msk [vmem:[#allocation2] sm:$0xff] %vm100, 0.0
    %102 = vst.msk [vmem:[#allocation2 + $0x10] sm:$0xff] %vm100, 0.0
    %vm103 = vcmask 58368
    %104 = vst.msk [vmem:[#allocation2 + $0x20] sm:$0x3] %vm103, 0.0
    %105 = vst.msk [vmem:[#allocation2 + $0x30] sm:$0xff] %vm100, 0.0
    %106 = vst.msk [vmem:[#allocation2 + $0x40] sm:$0xff] %vm100, 0.0
    %107 = vst.msk [vmem:[#allocation2 + $0x50] sm:$0x3] %vm103, 0.0
    %vm108 = vcmask 130112
    %109 = vst.msk [vmem:[#allocation2 + $0x8] sm:$0xff] %vm108, 0.0
    %110 = vst.msk [vmem:[#allocation2 + $0x18] sm:$0xff] %vm108, 0.0
    %vm111 = vcmask 123968
    %112 = vst.msk [vmem:[#allocation2 + $0x28] sm:$0x3] %vm111, 0.0
    %113 = vst.msk [vmem:[#allocation2 + $0x38] sm:$0xff] %vm108, 0.0
    %114 = vst.msk [vmem:[#allocation2 + $0x48] sm:$0xff] %vm108, 0.0
    %115 = vst.msk [vmem:[#allocation2 + $0x58] sm:$0x3] %vm111, 0.0
    %v116 = vld [vmem:[#allocation3] sm:$0xff]
    %v117 = vld [vmem:[#allocation3 + $0x8] sm:$0xff]
    %v118 = vld [vmem:[#allocation3 + $0x10] sm:$0xff]
    %v119 = vld [vmem:[#allocation3 + $0x18] sm:$0xff]
    %vm124 = vcmask 1040384
    %v125 = vrot.slane %v116, 7
    %v126 = vrot.slane %v117, 7
    %v127 = vsel %vm124, %v125, %v126
    %v128 = vrot.slane %v118, 7
    %v129 = vrot.slane %v119, 7
    %v130 = vsel %vm124, %v128, %v129
    %131 = vrot.lane.b32.xlu0 %v125, 8
    %v132 = vpop.permute.xlu0 %131
    %133 = vrot.lane.b32.xlu0 %v127, 8
    %v134 = vpop.permute.xlu0 %133
    %135 = vrot.lane.b32.xlu0 %v126, 8
    %v136 = vpop.permute.xlu0 %135
    %137 = vrot.lane.b32.xlu0 %v128, 8
    %v138 = vpop.permute.xlu0 %137
    %139 = vrot.lane.b32.xlu0 %v130, 8
    %v140 = vpop.permute.xlu0 %139
    %141 = vrot.lane.b32.xlu0 %v129, 8
    %v142 = vpop.permute.xlu0 %141
    %vm149 = vcmask 1047617
    %150 = vst.msk [vmem:[#allocation2] sm:$0xfe] %vm149, %v132
    %vm151 = vcmask 64513
    %152 = vst.msk [vmem:[#allocation2 + $0x8] sm:$0xfe] %vm151, %v132
    %vm153 = vcmask 1047616
    %154 = vst.msk [vmem:[#allocation2 + $0x10] sm:$0xff] %vm153, %v134
    %155 = vst.msk [vmem:[#allocation2 + $0x18] sm:$0xff] %vm100, %v134
    %vm156 = vcmask 1040448
    %157 = vst.msk [vmem:[#allocation2 + $0x20] sm:$0x1] %vm156, %v136
    %vm158 = vcmask 57344
    %159 = vst.msk [vmem:[#allocation2 + $0x28] sm:$0x1] %vm158, %v136
    %160 = vst.msk [vmem:[#allocation2 + $0x30] sm:$0xfe] %vm149, %v138
    %161 = vst.msk [vmem:[#allocation2 + $0x38] sm:$0xfe] %vm151, %v138
    %162 = vst.msk [vmem:[#allocation2 + $0x40] sm:$0xff] %vm153, %v140
    %163 = vst.msk [vmem:[#allocation2 + $0x48] sm:$0xff] %vm100, %v140
    %164 = vst.msk [vmem:[#allocation2 + $0x50] sm:$0x1] %vm156, %v142
    %165 = vst.msk [vmem:[#allocation2 + $0x58] sm:$0x1] %vm158, %v142
    %v166 = vld [vmem:[#allocation2] sm:$0xff]
    %v167 = vld [vmem:[#allocation2 + $0x8] sm:$0xff]
    %v168 = vld [vmem:[#allocation2 + $0x10] sm:$0xff]
    %v169 = vld [vmem:[#allocation2 + $0x18] sm:$0xff]
    %v170 = vld [vmem:[#allocation2 + $0x30] sm:$0xff]
    %v171 = vld [vmem:[#allocation2 + $0x38] sm:$0xff]
    %v172 = vld [vmem:[#allocation2 + $0x40] sm:$0xff]
    %v173 = vld [vmem:[#allocation2 + $0x48] sm:$0xff]
    %v174 = vld [vmem:[#allocation2] sm:$0xfe]
    %v175 = vld [vmem:[#allocation2 + $0x8] sm:$0xfe]
    %v176 = vld [vmem:[#allocation2 + $0x20] sm:$0x1]
    %v177 = vld [vmem:[#allocation2 + $0x28] sm:$0x1]
    %v178 = vld [vmem:[#allocation2 + $0x30] sm:$0xfe]
    %v179 = vld [vmem:[#allocation2 + $0x38] sm:$0xfe]
    %v180 = vld [vmem:[#allocation2 + $0x50] sm:$0x1]
    %v181 = vld [vmem:[#allocation2 + $0x58] sm:$0x1]
    %vm194 = vcmask 1046528
    %v195 = vrot.slane %v174, 1
    %v196 = vrot.slane %v168, 1
    %v197 = vsel %vm194, %v195, %v196
    %v198 = vrot.slane %v175, 1
    %v199 = vrot.slane %v169, 1
    %v200 = vsel %vm194, %v198, %v199
    %v201 = vrot.slane %v176, 1
    %v202 = vsel %vm194, %v196, %v201
    %v203 = vrot.slane %v177, 1
    %v204 = vsel %vm194, %v199, %v203
    %v205 = vrot.slane %v178, 1
    %v206 = vrot.slane %v172, 1
    %v207 = vsel %vm194, %v205, %v206
    %v208 = vrot.slane %v179, 1
    %v209 = vrot.slane %v173, 1
    %v210 = vsel %vm194, %v208, %v209
    %v211 = vrot.slane %v180, 1
    %v212 = vsel %vm194, %v206, %v211
    %v213 = vrot.slane %v181, 1
    %v214 = vsel %vm194, %v209, %v213
    %v215 = vld [vmem:[#allocation2] sm:$0xfc]
    %v216 = vld [vmem:[#allocation2 + $0x8] sm:$0xfc]
    %v217 = vld [vmem:[#allocation2 + $0x20] sm:$0x3]
    %v218 = vld [vmem:[#allocation2 + $0x28] sm:$0x3]
    %v219 = vld [vmem:[#allocation2 + $0x30] sm:$0xfc]
    %v220 = vld [vmem:[#allocation2 + $0x38] sm:$0xfc]
    %v221 = vld [vmem:[#allocation2 + $0x50] sm:$0x3]
    %v222 = vld [vmem:[#allocation2 + $0x58] sm:$0x3]
    %vm231 = vcmask 1045504
    %v232 = vrot.slane %v215, 2
    %v233 = vrot.slane %v168, 2
    %v234 = vsel %vm231, %v232, %v233
    %v235 = vrot.slane %v216, 2
    %v236 = vrot.slane %v169, 2
    %v237 = vsel %vm231, %v235, %v236
    %v238 = vrot.slane %v217, 2
    %v239 = vsel %vm231, %v233, %v238
    %v240 = vrot.slane %v218, 2
    %v241 = vsel %vm231, %v236, %v240
    %v242 = vrot.slane %v219, 2
    %v243 = vrot.slane %v172, 2
    %v244 = vsel %vm231, %v242, %v243
    %v245 = vrot.slane %v220, 2
    %v246 = vrot.slane %v173, 2
    %v247 = vsel %vm231, %v245, %v246
    %v248 = vrot.slane %v221, 2
    %v249 = vsel %vm231, %v243, %v248
    %v250 = vrot.slane %v222, 2
    %v251 = vsel %vm231, %v246, %v250
    %252 = vrot.lane.b32.xlu0 %v197, 16
    %v253 = vpop.permute.xlu0 %252
    %254 = vrot.lane.b32.xlu0 %v200, 16
    %v255 = vpop.permute.xlu0 %254
    %256 = vrot.lane.b32.xlu0 %v202, 16
    %v257 = vpop.permute.xlu0 %256
    %258 = vrot.lane.b32.xlu0 %v204, 16
    %v259 = vpop.permute.xlu0 %258
    %260 = vrot.lane.b32.xlu0 %v207, 16
    %v261 = vpop.permute.xlu0 %260
    %262 = vrot.lane.b32.xlu0 %v210, 16
    %v263 = vpop.permute.xlu0 %262
    %264 = vrot.lane.b32.xlu0 %v212, 16
    %v265 = vpop.permute.xlu0 %264
    %266 = vrot.lane.b32.xlu0 %v214, 16
    %v267 = vpop.permute.xlu0 %266
    %vm268 = vcmask 130048
    %v269 = vsel %vm268, %v253, %v255
    %v270 = vsel %vm268, %v257, %v259
    %v271 = vsel %vm268, %v261, %v263
    %v272 = vsel %vm268, %v265, %v267
    %281 = vrot.lane.b32.xlu0 %v234, 32
    %v282 = vpop.permute.xlu0 %281
    %283 = vrot.lane.b32.xlu0 %v237, 32
    %v284 = vpop.permute.xlu0 %283
    %285 = vrot.lane.b32.xlu0 %v239, 32
    %v286 = vpop.permute.xlu0 %285
    %287 = vrot.lane.b32.xlu0 %v241, 32
    %v288 = vpop.permute.xlu0 %287
    %289 = vrot.lane.b32.xlu0 %v244, 32
    %v290 = vpop.permute.xlu0 %289
    %291 = vrot.lane.b32.xlu0 %v247, 32
    %v292 = vpop.permute.xlu0 %291
    %293 = vrot.lane.b32.xlu0 %v249, 32
    %v294 = vpop.permute.xlu0 %293
    %295 = vrot.lane.b32.xlu0 %v251, 32
    %v296 = vpop.permute.xlu0 %295
    %vm297 = vcmask 261120
    %v298 = vsel %vm297, %v282, %v284
    %v299 = vsel %vm297, %v286, %v288
    %v300 = vsel %vm297, %v290, %v292
    %v301 = vsel %vm297, %v294, %v296
    %v306 = vsel %vm268, %v167, %v253
    %v307 = vsel %vm268, %v169, %v257
    %v308 = vsel %vm268, %v171, %v261
    %v309 = vsel %vm268, %v173, %v265
    %v310 = vsel %vm297, %v269, %v282
    %v311 = vsel %vm297, %v270, %v286
    %v312 = vsel %vm297, %v271, %v290
    %v313 = vsel %vm297, %v272, %v294
    %v314 = vld [vmem:[#allocation6] sm:$0xff]
    %v315 = vld [vmem:[#allocation6 + $0x8] sm:$0xff]
    %v316 = vld [vmem:[#allocation6 + $0x10] sm:$0xff]
    %v317 = vld [vmem:[#allocation6 + $0x18] sm:$0xff]
    %v318 = vld [vmem:[#allocation6 + $0x20] sm:$0xff]
    %v319 = vld [vmem:[#allocation6 + $0x28] sm:$0xff]
    %v320 = vld [vmem:[#allocation6 + $0x30] sm:$0xff]
    %v321 = vld [vmem:[#allocation6 + $0x38] sm:$0xff]
    %v322 = vld [vmem:[#allocation6 + $0x40] sm:$0xff]
    %v323 = vld [vmem:[#allocation6 + $0x48] sm:$0xff]
    %v324 = vld [vmem:[#allocation6 + $0x50] sm:$0xff]
    %v325 = vld [vmem:[#allocation6 + $0x58] sm:$0xff]
    %v326 = vld [vmem:[#allocation6 + $0x60] sm:$0xff]
    %v327 = vld [vmem:[#allocation6 + $0x68] sm:$0xff]
    %v328 = vld [vmem:[#allocation6 + $0x70] sm:$0xff]
    %v329 = vld [vmem:[#allocation6 + $0x78] sm:$0xff]
    %v330 = vld [vmem:[#allocation6 + $0x80] sm:$0xff]
    %v331 = vld [vmem:[#allocation6 + $0x88] sm:$0xff]
    %v332 = vld [vmem:[#allocation6 + $0x90] sm:$0xff]
    %v333 = vld [vmem:[#allocation6 + $0x98] sm:$0xff]
    %v334 = vld [vmem:[#allocation6 + $0xa0] sm:$0xff]
    %v335 = vld [vmem:[#allocation6 + $0xa8] sm:$0xff]
    %v336 = vld [vmem:[#allocation6 + $0xb0] sm:$0xff]
    %v337 = vld [vmem:[#allocation6 + $0xb8] sm:$0xff]
    %v338 = vld [vmem:[#allocation6 + $0xc0] sm:$0xff]
    %v339 = vld [vmem:[#allocation6 + $0xc8] sm:$0xff]
    %v340 = vld [vmem:[#allocation6 + $0xd0] sm:$0xff]
    %v341 = vld [vmem:[#allocation6 + $0xd8] sm:$0xff]
    %v342 = vld [vmem:[#allocation6 + $0xe0] sm:$0xff]
    %v343 = vld [vmem:[#allocation6 + $0xe8] sm:$0xff]
    %v344 = vld [vmem:[#allocation6 + $0xf0] sm:$0xff]
    %v345 = vld [vmem:[#allocation6 + $0xf8] sm:$0xff]
    %v346 = vld [vmem:[#allocation6 + $0x100] sm:$0xff]
    %v347 = vld [vmem:[#allocation6 + $0x108] sm:$0xff]
    %v348 = vld [vmem:[#allocation6 + $0x110] sm:$0xff]
    %v349 = vld [vmem:[#allocation6 + $0x118] sm:$0xff]
    %v350 = vld [vmem:[#allocation6 + $0x120] sm:$0xff]
    %v351 = vld [vmem:[#allocation6 + $0x128] sm:$0xff]
    %v352 = vld [vmem:[#allocation6 + $0x130] sm:$0xff]
    %v353 = vld [vmem:[#allocation6 + $0x138] sm:$0xff]
    %v354 = vld [vmem:[#allocation6 + $0x140] sm:$0xff]
    %v355 = vld [vmem:[#allocation6 + $0x148] sm:$0xff]
    %v356 = vld [vmem:[#allocation6 + $0x150] sm:$0xff]
    %v357 = vld [vmem:[#allocation6 + $0x158] sm:$0xff]
    %v358 = vld [vmem:[#allocation6 + $0x160] sm:$0xff]
    %v359 = vld [vmem:[#allocation6 + $0x168] sm:$0xff]
    %v360 = vld [vmem:[#allocation6 + $0x170] sm:$0xff]
    %v361 = vld [vmem:[#allocation6 + $0x178] sm:$0xff]
    %v362 = vld [vmem:[#allocation6 + $0x180] sm:$0xff]
    %v363 = vld [vmem:[#allocation6 + $0x188] sm:$0xff]
    %v364 = vld [vmem:[#allocation6 + $0x190] sm:$0xff]
    %v365 = vld [vmem:[#allocation6 + $0x198] sm:$0xff]
    %v366 = vld [vmem:[#allocation6 + $0x1a0] sm:$0xff]
    %v367 = vld [vmem:[#allocation6 + $0x1a8] sm:$0xff]
    %vm368 = vcmask 392192
    %v369 = vsel %vm368, %v298, 0
    %v371 = vsel %vm368, %v299, 0
    %v373 = vsel %vm368, %v300, 0
    %v375 = vsel %vm368, %v301, 0
    %377 = vmatprep.subr.mxu0 0.0
    %378 = vmatpush1.msra.mxu0 %v314
    %379 = vmatprep.subr.mxu0 0.0
    %380 = vmatpush1.msra.mxu0 %v315
    %381 = vmatprep.subr.mxu0 0.0
    %382 = vmatpush1.msra.mxu0 %v316
    %383 = vmatprep.subr.mxu0 0.0
    %384 = vmatpush1.msra.mxu0 %v317
    %385 = vmatprep.subr.mxu0 0.0
    %386 = vmatpush1.msra.mxu0 %v318
    %387 = vmatprep.subr.mxu0 0.0
    %388 = vmatpush1.msra.mxu0 %v319
    %389 = vmatprep.subr.mxu0 0.0
    %390 = vmatpush1.msra.mxu0 %v320
    %391 = vmatprep.subr.mxu0 0.0
    %392 = vmatpush1.msra.mxu0 %v321
    %393 = vmatprep.subr.mxu0 0.0
    %394 = vmatpush1.msra.mxu0 %v322
    %395 = vmatprep.subr.mxu0 0.0
    %396 = vmatpush1.msra.mxu0 %v323
    %397 = vmatprep.subr.mxu0 0.0
    %398 = vmatpush1.msra.mxu0 %v324
    %399 = vmatprep.subr.mxu0 0.0
    %400 = vmatpush1.msra.mxu0 %v325
    %401 = vmatprep.subr.mxu0 0.0
    %402 = vmatpush1.msra.mxu0 %v326
    %403 = vmatprep.subr.mxu0 0.0
    %404 = vmatpush1.msra.mxu0 %v327
    %405 = vmatprep.subr.mxu0 0.0
    %406 = vmatpush1.msra.mxu0 %v328
    %407 = vmatprep.subr.mxu0 0.0
    %408 = vmatpush1.msra.mxu0 %v329
    %409 = vmatprep.subr.mxu0 0.0
    %410 = vmatpush1.msra.mxu0 %v330
    %411 = vmatprep.subr.mxu0 0.0
    %412 = vmatpush1.msra.mxu0 %v331
    %413 = vmatprep.subr.mxu0 0.0
    %414 = vmatpush1.msra.mxu0 %v332
    %415 = vmatprep.subr.mxu0 0.0
    %416 = vmatpush1.msra.mxu0 %v333
    %417 = vmatprep.subr.mxu0 0.0
    %418 = vmatpush1.msra.mxu0 %v334
    %419 = vmatprep.subr.mxu0 0.0
    %420 = vmatpush1.msra.mxu0 %v335
    %421 = vmatprep.subr.mxu0 0.0
    %422 = vmatpush1.msra.mxu0 %v336
    %423 = vmatprep.subr.mxu0 0.0
    %424 = vmatpush1.msra.mxu0 %v337
    %425 = vmatprep.subr.mxu0 0.0
    %426 = vmatpush1.msra.mxu0 %v338
    %427 = vmatprep.subr.mxu0 0.0
    %428 = vmatpush1.msra.mxu0 %v339
    %429 = vmatprep.subr.mxu0 0.0
    %430 = vmatpush1.msra.mxu0 %v340
    %431 = vmatprep.subr.mxu0 0.0
    %432 = vmatpush1.msra.mxu0 %v341
    %433 = vmatprep.subr.mxu0 0.0
    %434 = vmatpush1.msra.mxu0 %v342
    %435 = vmatprep.subr.mxu0 0.0
    %436 = vmatpush1.msra.mxu0 %v343
    %437 = vmatprep.subr.mxu0 0.0
    %438 = vmatpush1.msra.mxu0 %v344
    %439 = vmatprep.subr.mxu0 0.0
    %440 = vmatpush1.msra.mxu0 %v345
    %441 = vmatprep.mubr.f32.mxu0 %v306
    %442 = vmatmul.mubr.f32.gmra.mrb[0].mxu0 %v166
    %v443 = vpop.f32.mrb[0].mxu0
    %v444 = vadd.f32 0.0, %v443
    %v445 = vpop.f32.mrb[0].mxu0
    %446 = vmatprep.mubr.f32.mxu0 %v307
    %447 = vmatmul.mubr.f32.gmra.mrb[0].mxu0 %v168
    %v448 = vpop.f32.mrb[0].mxu0
    %v449 = vadd.f32 0.0, %v448
    %v450 = vpop.f32.mrb[0].mxu0
    %451 = vmatprep.mubr.f32.mxu0 %v308
    %452 = vmatmul.mubr.f32.gmra.mrb[0].mxu0 %v170
    %v453 = vpop.f32.mrb[0].mxu0
    %v454 = vadd.f32 0.0, %v453
    %v455 = vpop.f32.mrb[0].mxu0
    %456 = vmatprep.mubr.f32.mxu0 %v309
    %457 = vmatmul.mubr.f32.gmra.mrb[0].mxu0 %v172
    %v458 = vpop.f32.mrb[0].mxu0
    %v459 = vadd.f32 0.0, %v458
    %v460 = vpop.f32.mrb[0].mxu0
    %461 = vdwg.mxu0
    %462 = vmatprep.subr.mxu0 0.0
    %463 = vmatpush1.msra.mxu0 %v346
    %464 = vmatprep.subr.mxu0 0.0
    %465 = vmatpush1.msra.mxu0 %v347
    %466 = vmatprep.subr.mxu0 0.0
    %467 = vmatpush1.msra.mxu0 %v348
    %468 = vmatprep.subr.mxu0 0.0
    %469 = vmatpush1.msra.mxu0 %v349
    %470 = vmatprep.subr.mxu0 0.0
    %471 = vmatpush1.msra.mxu0 %v350
    %472 = vmatprep.subr.mxu0 0.0
    %473 = vmatpush1.msra.mxu0 %v351
    %474 = vmatprep.subr.mxu0 0.0
    %475 = vmatpush1.msra.mxu0 %v352
    %476 = vmatprep.subr.mxu0 0.0
    %477 = vmatpush1.msra.mxu0 %v353
    %478 = vmatprep.subr.mxu0 0.0
    %479 = vmatpush1.msra.mxu0 %v354
    %480 = vmatprep.subr.mxu0 0.0
    %481 = vmatpush1.msra.mxu0 %v355
    %482 = vmatprep.subr.mxu0 0.0
    %483 = vmatpush1.msra.mxu0 %v356
    %484 = vmatprep.subr.mxu0 0.0
    %485 = vmatpush1.msra.mxu0 %v357
    %486 = vmatprep.subr.mxu0 0.0
    %487 = vmatpush1.msra.mxu0 %v358
    %488 = vmatprep.subr.mxu0 0.0
    %489 = vmatpush1.msra.mxu0 %v359
    %490 = vmatprep.subr.mxu0 0.0
    %491 = vmatpush1.msra.mxu0 %v360
    %492 = vmatprep.subr.mxu0 0.0
    %493 = vmatpush1.msra.mxu0 %v361
    %494 = vmatprep.subr.mxu0 0.0
    %495 = vmatpush1.msra.mxu0 %v362
    %496 = vmatprep.subr.mxu0 0.0
    %497 = vmatpush1.msra.mxu0 %v363
    %498 = vmatprep.subr.mxu0 0.0
    %499 = vmatpush1.msra.mxu0 %v364
    %500 = vmatprep.subr.mxu0 0.0
    %501 = vmatpush1.msra.mxu0 %v365
    %502 = vmatprep.subr.mxu0 0.0
    %503 = vmatpush1.msra.mxu0 %v366
    %504 = vmatprep.subr.mxu0 0.0
    %505 = vmatpush1.msra.mxu0 %v367
    %506 = vmatprep.subr.mxu0 0.0
    %507 = vmatpush1.msra.mxu0 0.0
    %508 = vmatprep.subr.mxu0 0.0
    %509 = vmatpush1.msra.mxu0 0.0
    %510 = vmatprep.subr.mxu0 0.0
    %511 = vmatpush1.msra.mxu0 0.0
    %512 = vmatprep.subr.mxu0 0.0
    %513 = vmatpush1.msra.mxu0 0.0
    %514 = vmatprep.subr.mxu0 0.0
    %515 = vmatpush1.msra.mxu0 0.0
    %516 = vmatprep.subr.mxu0 0.0
    %517 = vmatpush1.msra.mxu0 0.0
    %518 = vmatprep.subr.mxu0 0.0
    %519 = vmatpush1.msra.mxu0 0.0
    %520 = vmatprep.subr.mxu0 0.0
    %521 = vmatpush1.msra.mxu0 0.0
    %522 = vmatprep.subr.mxu0 0.0
    %523 = vmatpush1.msra.mxu0 0.0
    %524 = vmatprep.subr.mxu0 0.0
    %525 = vmatpush1.msra.mxu0 0.0
    %526 = vmatprep.mubr.f32.mxu0 %v369
    %527 = vmatmul.mubr.f32.gmra.mrb[0].mxu0 %v310
    %v528 = vpop.f32.mrb[0].mxu0
    %v529 = vadd.f32 %v444, %v528
    %v530 = vpop.f32.mrb[0].mxu0
    %531 = vmatprep.mubr.f32.mxu0 %v371
    %532 = vmatmul.mubr.f32.gmra.mrb[0].mxu0 %v311
    %v533 = vpop.f32.mrb[0].mxu0
    %v534 = vadd.f32 %v449, %v533
    %v535 = vpop.f32.mrb[0].mxu0
    %536 = vmatprep.mubr.f32.mxu0 %v373
    %537 = vmatmul.mubr.f32.gmra.mrb[0].mxu0 %v312
    %v538 = vpop.f32.mrb[0].mxu0
    %v539 = vadd.f32 %v454, %v538
    %v540 = vpop.f32.mrb[0].mxu0
    %541 = vmatprep.mubr.f32.mxu0 %v375
    %542 = vmatmul.mubr.f32.gmra.mrb[0].mxu0 %v313
    %v543 = vpop.f32.mrb[0].mxu0
    %v544 = vadd.f32 %v459, %v543
    %v545 = vpop.f32.mrb[0].mxu0
    %546 = vdwg.mxu0
    %v547 = vadd.f32 %v529, %v534
    %v548 = vadd.f32 %v547, %v539
    %v549 = vadd.f32 %v548, %v544
    %v550 = vrot.slane %v549, 4
    %v551 = vadd.f32 %v549, %v550
    %v552 = vrot.slane %v551, 2
    %v553 = vadd.f32 %v551, %v552
    %v554 = vrot.slane %v553, 1
    %v555 = vadd.f32 %v553, %v554
    %v556 = vld [vmem:[#allocation9] sm:$0xff]
    %v557 = vld [vmem:[#allocation9 + $0x8] sm:$0xff]
    %v558 = vld [vmem:[#allocation9 + $0x10] sm:$0xff]
    %v559 = vld [vmem:[#allocation9 + $0x18] sm:$0xff]
    %v560 = vld [vmem:[#allocation9 + $0x20] sm:$0xff]
    %v561 = vld [vmem:[#allocation9 + $0x28] sm:$0xff]
    %v562 = vld [vmem:[#allocation9 + $0x30] sm:$0xff]
    %v563 = vld [vmem:[#allocation9 + $0x38] sm:$0xff]
    %v564 = vld [vmem:[#allocation9 + $0x40] sm:$0xff]
    %v565 = vld [vmem:[#allocation9 + $0x48] sm:$0xff]
    %v566 = vld [vmem:[#allocation9 + $0x50] sm:$0xff]
    %v567 = vld [vmem:[#allocation9 + $0x58] sm:$0xff]
    %v568 = vld [vmem:[#allocation9 + $0x60] sm:$0xff]
    %v569 = vld [vmem:[#allocation9 + $0x68] sm:$0xff]
    %v570 = vld [vmem:[#allocation9 + $0x70] sm:$0xff]
    %v571 = vld [vmem:[#allocation9 + $0x78] sm:$0xff]
    %572 = vmatprep.subr.mxu0 0.0
    %573 = vmatpush1.msra.mxu0 %v556
    %574 = vmatprep.subr.mxu0 0.0
    %575 = vmatpush1.msra.mxu0 %v557
    %576 = vmatprep.subr.mxu0 0.0
    %577 = vmatpush1.msra.mxu0 %v558
    %578 = vmatprep.subr.mxu0 0.0
    %579 = vmatpush1.msra.mxu0 %v559
    %580 = vmatprep.subr.mxu0 0.0
    %581 = vmatpush1.msra.mxu0 %v560
    %582 = vmatprep.subr.mxu0 0.0
    %583 = vmatpush1.msra.mxu0 %v561
    %584 = vmatprep.subr.mxu0 0.0
    %585 = vmatpush1.msra.mxu0 %v562
    %586 = vmatprep.subr.mxu0 0.0
    %587 = vmatpush1.msra.mxu0 %v563
    %588 = vmatprep.subr.mxu0 0.0
    %589 = vmatpush1.msra.mxu0 %v564
    %590 = vmatprep.subr.mxu0 0.0
    %591 = vmatpush1.msra.mxu0 %v565
    %592 = vmatprep.subr.mxu0 0.0
    %593 = vmatpush1.msra.mxu0 %v566
    %594 = vmatprep.subr.mxu0 0.0
    %595 = vmatpush1.msra.mxu0 %v567
    %596 = vmatprep.subr.mxu0 0.0
    %597 = vmatpush1.msra.mxu0 %v568
    %598 = vmatprep.subr.mxu0 0.0
    %599 = vmatpush1.msra.mxu0 %v569
    %600 = vmatprep.subr.mxu0 0.0
    %601 = vmatpush1.msra.mxu0 %v570
    %602 = vmatprep.subr.mxu0 0.0
    %603 = vmatpush1.msra.mxu0 %v571
    %604 = vmatprep.subr.mxu0 0.0
    %605 = vmatpush1.msra.mxu0 0.0
    %606 = vmatprep.subr.mxu0 0.0
    %607 = vmatpush1.msra.mxu0 0.0
    %608 = vmatprep.subr.mxu0 0.0
    %609 = vmatpush1.msra.mxu0 0.0
    %610 = vmatprep.subr.mxu0 0.0
    %611 = vmatpush1.msra.mxu0 0.0
    %612 = vmatprep.subr.mxu0 0.0
    %613 = vmatpush1.msra.mxu0 0.0
    %614 = vmatprep.subr.mxu0 0.0
    %615 = vmatpush1.msra.mxu0 0.0
    %616 = vmatprep.subr.mxu0 0.0
    %617 = vmatpush1.msra.mxu0 0.0
    %618 = vmatprep.subr.mxu0 0.0
    %619 = vmatpush1.msra.mxu0 0.0
    %620 = vmatprep.subr.mxu0 0.0
    %621 = vmatpush1.msra.mxu0 0.0
    %622 = vmatprep.subr.mxu0 0.0
    %623 = vmatpush1.msra.mxu0 0.0
    %624 = vmatprep.subr.mxu0 0.0
    %625 = vmatpush1.msra.mxu0 0.0
    %626 = vmatprep.subr.mxu0 0.0
    %627 = vmatpush1.msra.mxu0 0.0
    %628 = vmatprep.subr.mxu0 0.0
    %629 = vmatpush1.msra.mxu0 0.0
    %630 = vmatprep.subr.mxu0 0.0
    %631 = vmatpush1.msra.mxu0 0.0
    %632 = vmatprep.subr.mxu0 0.0
    %633 = vmatpush1.msra.mxu0 0.0
    %634 = vmatprep.subr.mxu0 0.0
    %635 = vmatpush1.msra.mxu0 0.0
    %636 = vmatprep.mubr.f32.mxu0 0.0
    %637 = vmatmul.mubr.f32.gmra.mrb[0].mxu0 %v555
    %v638 = vpop.f32.mrb[0].mxu0
    %v639 = vadd.f32 0.0, %v638
    %v640 = vpop.f32.mrb[0].mxu0
    %641 = vdwg.mxu0
    %v642 = vlaneseq
    %v643 = vshrl.u32 %v642, 7
    %v644 = vsub.s32 0, %v643
    %v645 = vrot.slane %v639, %v644
    %v646 = vsub.f32 %v529, %v645
    %v647 = vsub.f32 %v534, %v645
    %v648 = vsub.f32 %v539, %v645
    %v649 = vsub.f32 %v544, %v645
    %v650 = vmul.f32 %v646, %v646
    %v651 = vmul.f32 %v647, %v647
    %v652 = vmul.f32 %v648, %v648
    %v653 = vmul.f32 %v649, %v649
    %v654 = vadd.f32 %v650, %v651
    %v655 = vadd.f32 %v654, %v652
    %v656 = vadd.f32 %v655, %v653
    %v657 = vrot.slane %v656, 4
    %v658 = vadd.f32 %v656, %v657
    %v659 = vrot.slane %v658, 2
    %v660 = vadd.f32 %v658, %v659
    %v661 = vrot.slane %v660, 1
    %v662 = vadd.f32 %v660, %v661
    %663 = vmatprep.subr.mxu0 0.0
    %664 = vmatpush1.msra.mxu0 %v556
    %665 = vmatprep.subr.mxu0 0.0
    %666 = vmatpush1.msra.mxu0 %v557
    %667 = vmatprep.subr.mxu0 0.0
    %668 = vmatpush1.msra.mxu0 %v558
    %669 = vmatprep.subr.mxu0 0.0
    %670 = vmatpush1.msra.mxu0 %v559
    %671 = vmatprep.subr.mxu0 0.0
    %672 = vmatpush1.msra.mxu0 %v560
    %673 = vmatprep.subr.mxu0 0.0
    %674 = vmatpush1.msra.mxu0 %v561
    %675 = vmatprep.subr.mxu0 0.0
    %676 = vmatpush1.msra.mxu0 %v562
    %677 = vmatprep.subr.mxu0 0.0
    %678 = vmatpush1.msra.mxu0 %v563
    %679 = vmatprep.subr.mxu0 0.0
    %680 = vmatpush1.msra.mxu0 %v564
    %681 = vmatprep.subr.mxu0 0.0
    %682 = vmatpush1.msra.mxu0 %v565
    %683 = vmatprep.subr.mxu0 0.0
    %684 = vmatpush1.msra.mxu0 %v566
    %685 = vmatprep.subr.mxu0 0.0
    %686 = vmatpush1.msra.mxu0 %v567
    %687 = vmatprep.subr.mxu0 0.0
    %688 = vmatpush1.msra.mxu0 %v568
    %689 = vmatprep.subr.mxu0 0.0
    %690 = vmatpush1.msra.mxu0 %v569
    %691 = vmatprep.subr.mxu0 0.0
    %692 = vmatpush1.msra.mxu0 %v570
    %693 = vmatprep.subr.mxu0 0.0
    %694 = vmatpush1.msra.mxu0 %v571
    %695 = vmatprep.subr.mxu0 0.0
    %696 = vmatpush1.msra.mxu0 0.0
    %697 = vmatprep.subr.mxu0 0.0
    %698 = vmatpush1.msra.mxu0 0.0
    %699 = vmatprep.subr.mxu0 0.0
    %700 = vmatpush1.msra.mxu0 0.0
    %701 = vmatprep.subr.mxu0 0.0
    %702 = vmatpush1.msra.mxu0 0.0
    %703 = vmatprep.subr.mxu0 0.0
    %704 = vmatpush1.msra.mxu0 0.0
    %705 = vmatprep.subr.mxu0 0.0
    %706 = vmatpush1.msra.mxu0 0.0
    %707 = vmatprep.subr.mxu0 0.0
    %708 = vmatpush1.msra.mxu0 0.0
    %709 = vmatprep.subr.mxu0 0.0
    %710 = vmatpush1.msra.mxu0 0.0
    %711 = vmatprep.subr.mxu0 0.0
    %712 = vmatpush1.msra.mxu0 0.0
    %713 = vmatprep.subr.mxu0 0.0
    %714 = vmatpush1.msra.mxu0 0.0
    %715 = vmatprep.subr.mxu0 0.0
    %716 = vmatpush1.msra.mxu0 0.0
    %717 = vmatprep.subr.mxu0 0.0
    %718 = vmatpush1.msra.mxu0 0.0
    %719 = vmatprep.subr.mxu0 0.0
    %720 = vmatpush1.msra.mxu0 0.0
    %721 = vmatprep.subr.mxu0 0.0
    %722 = vmatpush1.msra.mxu0 0.0
    %723 = vmatprep.subr.mxu0 0.0
    %724 = vmatpush1.msra.mxu0 0.0
    %725 = vmatprep.subr.mxu0 0.0
    %726 = vmatpush1.msra.mxu0 0.0
    %727 = vmatprep.mubr.f32.mxu0 0.0
    %728 = vmatmul.mubr.f32.gmra.mrb[0].mxu0 %v662
    %v729 = vpop.f32.mrb[0].mxu0
    %v730 = vadd.f32 1e-05, %v729
    %v731 = vpop.f32.mrb[0].mxu0
    %732 = vdwg.mxu0
    %v733 = vrsqrt.pop %v730
    %v734 = vlaneseq
    %v735 = vshrl.u32 %v734, 7
    %v736 = vsub.s32 0, %v735
    %v737 = vrot.slane %v733, %v736
    %v738 = vmul.f32 %v646, %v737
    %v739 = vmul.f32 %v647, %v737
    %v740 = vmul.f32 %v648, %v737
    %v741 = vmul.f32 %v649, %v737
    %v742 = vld [vmem:[%s2] sm:$0x1]
    %v744 = vlaneseq
    %v745 = vshrl.u32 %v744, 7
    %v746 = vsub.s32 0, %v745
    %v747 = vrot.slane %v742, %v746
    %v749 = vmul.f32 %v738, %v747
    %v750 = vmul.f32 %v739, %v747
    %v751 = vmul.f32 %v740, %v747
    %v752 = vmul.f32 %v741, %v747
    %v753 = vld [vmem:[%s3] sm:$0x1]
    %v755 = vlaneseq
    %v756 = vshrl.u32 %v755, 7
    %v757 = vsub.s32 0, %v756
    %v758 = vrot.slane %v753, %v757
    %v760 = vadd.f32 %v749, %v758
    %v761 = vadd.f32 %v750, %v758
    %v762 = vadd.f32 %v751, %v758
    %v763 = vadd.f32 %v752, %v758
    %v764 = vmax.f32 %v760, 0.0
    %v765 = vmax.f32 %v761, 0.0
    %v766 = vmax.f32 %v762, 0.0
    %v767 = vmax.f32 %v763, 0.0
    %v772 = vrot.slane %v764, 7
    %v773 = vrot.slane %v765, 7
    %v774 = vsel %vm124, %v772, %v773
    %v775 = vrot.slane %v766, 7
    %v776 = vrot.slane %v767, 7
    %v777 = vsel %vm124, %v775, %v776
    %778 = vrot.lane.b32.xlu0 %v772, 8
    %v779 = vpop.permute.xlu0 %778
    %780 = vrot.lane.b32.xlu0 %v774, 8
    %v781 = vpop.permute.xlu0 %780
    %782 = vrot.lane.b32.xlu0 %v773, 8
    %v783 = vpop.permute.xlu0 %782
    %784 = vrot.lane.b32.xlu0 %v775, 8
    %v785 = vpop.permute.xlu0 %784
    %786 = vrot.lane.b32.xlu0 %v777, 8
    %v787 = vpop.permute.xlu0 %786
    %788 = vrot.lane.b32.xlu0 %v776, 8
    %v789 = vpop.permute.xlu0 %788
    %796 = vst.msk [vmem:[#allocation2] sm:$0xfe] %vm149, %v779
    %797 = vst.msk [vmem:[#allocation2 + $0x8] sm:$0xfe] %vm151, %v779
    %798 = vst.msk [vmem:[#allocation2 + $0x10] sm:$0xff] %vm153, %v781
    %799 = vst.msk [vmem:[#allocation2 + $0x18] sm:$0xff] %vm100, %v781
    %800 = vst.msk [vmem:[#allocation2 + $0x20] sm:$0x1] %vm156, %v783
    %801 = vst.msk [vmem:[#allocation2 + $0x28] sm:$0x1] %vm158, %v783
    %802 = vst.msk [vmem:[#allocation2 + $0x30] sm:$0xfe] %vm149, %v785
    %803 = vst.msk [vmem:[#allocation2 + $0x38] sm:$0xfe] %vm151, %v785
    %804 = vst.msk [vmem:[#allocation2 + $0x40] sm:$0xff] %vm153, %v787
    %805 = vst.msk [vmem:[#allocation2 + $0x48] sm:$0xff] %vm100, %v787
    %806 = vst.msk [vmem:[#allocation2 + $0x50] sm:$0x1] %vm156, %v789
    %807 = vst.msk [vmem:[#allocation2 + $0x58] sm:$0x1] %vm158, %v789
    %v808 = vld [vmem:[#allocation2] sm:$0xff]
    %v809 = vld [vmem:[#allocation2 + $0x8] sm:$0xff]
    %v810 = vld [vmem:[#allocation2 + $0x10] sm:$0xff]
    %v811 = vld [vmem:[#allocation2 + $0x18] sm:$0xff]
    %v812 = vld [vmem:[#allocation2 + $0x30] sm:$0xff]
    %v813 = vld [vmem:[#allocation2 + $0x38] sm:$0xff]
    %v814 = vld [vmem:[#allocation2 + $0x40] sm:$0xff]
    %v815 = vld [vmem:[#allocation2 + $0x48] sm:$0xff]
    %v816 = vld [vmem:[#allocation2] sm:$0xfe]
    %v817 = vld [vmem:[#allocation2 + $0x8] sm:$0xfe]
    %v818 = vld [vmem:[#allocation2 + $0x20] sm:$0x1]
    %v819 = vld [vmem:[#allocation2 + $0x28] sm:$0x1]
    %v820 = vld [vmem:[#allocation2 + $0x30] sm:$0xfe]
    %v821 = vld [vmem:[#allocation2 + $0x38] sm:$0xfe]
    %v822 = vld [vmem:[#allocation2 + $0x50] sm:$0x1]
    %v823 = vld [vmem:[#allocation2 + $0x58] sm:$0x1]
    %v836 = vrot.slane %v816, 1
    %v837 = vrot.slane %v810, 1
    %v838 = vsel %vm194, %v836, %v837
    %v839 = vrot.slane %v817, 1
    %v840 = vrot.slane %v811, 1
    %v841 = vsel %vm194, %v839, %v840
    %v842 = vrot.slane %v818, 1
    %v843 = vsel %vm194, %v837, %v842
    %v844 = vrot.slane %v819, 1
    %v845 = vsel %vm194, %v840, %v844
    %v846 = vrot.slane %v820, 1
    %v847 = vrot.slane %v814, 1
    %v848 = vsel %vm194, %v846, %v847
    %v849 = vrot.slane %v821, 1
    %v850 = vrot.slane %v815, 1
    %v851 = vsel %vm194, %v849, %v850
    %v852 = vrot.slane %v822, 1
    %v853 = vsel %vm194, %v847, %v852
    %v854 = vrot.slane %v823, 1
    %v855 = vsel %vm194, %v850, %v854
    %v856 = vld [vmem:[#allocation2] sm:$0xfc]
    %v857 = vld [vmem:[#allocation2 + $0x8] sm:$0xfc]
    %v858 = vld [vmem:[#allocation2 + $0x20] sm:$0x3]
    %v859 = vld [vmem:[#allocation2 + $0x28] sm:$0x3]
    %v860 = vld [vmem:[#allocation2 + $0x30] sm:$0xfc]
    %v861 = vld [vmem:[#allocation2 + $0x38] sm:$0xfc]
    %v862 = vld [vmem:[#allocation2 + $0x50] sm:$0x3]
    %v863 = vld [vmem:[#allocation2 + $0x58] sm:$0x3]
    %v872 = vrot.slane %v856, 2
    %v873 = vrot.slane %v810, 2
    %v874 = vsel %vm231, %v872, %v873
    %v875 = vrot.slane %v857, 2
    %v876 = vrot.slane %v811, 2
    %v877 = vsel %vm231, %v875, %v876
    %v878 = vrot.slane %v858, 2
    %v879 = vsel %vm231, %v873, %v878
    %v880 = vrot.slane %v859, 2
    %v881 = vsel %vm231, %v876, %v880
    %v882 = vrot.slane %v860, 2
    %v883 = vrot.slane %v814, 2
    %v884 = vsel %vm231, %v882, %v883
    %v885 = vrot.slane %v861, 2
    %v886 = vrot.slane %v815, 2
    %v887 = vsel %vm231, %v885, %v886
    %v888 = vrot.slane %v862, 2
    %v889 = vsel %vm231, %v883, %v888
    %v890 = vrot.slane %v863, 2
    %v891 = vsel %vm231, %v886, %v890
    %892 = vrot.lane.b32.xlu0 %v838, 16
    %v893 = vpop.permute.xlu0 %892
    %894 = vrot.lane.b32.xlu0 %v841, 16
    %v895 = vpop.permute.xlu0 %894
    %896 = vrot.lane.b32.xlu0 %v843, 16
    %v897 = vpop.permute.xlu0 %896
    %898 = vrot.lane.b32.xlu0 %v845, 16
    %v899 = vpop.permute.xlu0 %898
    %900 = vrot.lane.b32.xlu0 %v848, 16
    %v901 = vpop.permute.xlu0 %900
    %902 = vrot.lane.b32.xlu0 %v851, 16
    %v903 = vpop.permute.xlu0 %902
    %904 = vrot.lane.b32.xlu0 %v853, 16
    %v905 = vpop.permute.xlu0 %904
    %906 = vrot.lane.b32.xlu0 %v855, 16
    %v907 = vpop.permute.xlu0 %906
    %v908 = vsel %vm268, %v893, %v895
    %v909 = vsel %vm268, %v897, %v899
    %v910 = vsel %vm268, %v901, %v903
    %v911 = vsel %vm268, %v905, %v907
    %920 = vrot.lane.b32.xlu0 %v874, 32
    %v921 = vpop.permute.xlu0 %920
    %922 = vrot.lane.b32.xlu0 %v877, 32
    %v923 = vpop.permute.xlu0 %922
    %924 = vrot.lane.b32.xlu0 %v879, 32
    %v925 = vpop.permute.xlu0 %924
    %926 = vrot.lane.b32.xlu0 %v881, 32
    %v927 = vpop.permute.xlu0 %926
    %928 = vrot.lane.b32.xlu0 %v884, 32
    %v929 = vpop.permute.xlu0 %928
    %930 = vrot.lane.b32.xlu0 %v887, 32
    %v931 = vpop.permute.xlu0 %930
    %932 = vrot.lane.b32.xlu0 %v889, 32
    %v933 = vpop.permute.xlu0 %932
    %934 = vrot.lane.b32.xlu0 %v891, 32
    %v935 = vpop.permute.xlu0 %934
    %v936 = vsel %vm297, %v921, %v923
    %v937 = vsel %vm297, %v925, %v927
    %v938 = vsel %vm297, %v929, %v931
    %v939 = vsel %vm297, %v933, %v935
    %v944 = vsel %vm268, %v809, %v893
    %v945 = vsel %vm268, %v811, %v897
    %v946 = vsel %vm268, %v813, %v901
    %v947 = vsel %vm268, %v815, %v905
    %v948 = vsel %vm297, %v908, %v921
    %v949 = vsel %vm297, %v909, %v925
    %v950 = vsel %vm297, %v910, %v929
    %v951 = vsel %vm297, %v911, %v933
    %v952 = vld [vmem:[#allocation8] sm:$0xff]
    %v953 = vld [vmem:[#allocation8 + $0x8] sm:$0xff]
    %v954 = vld [vmem:[#allocation8 + $0x10] sm:$0xff]
    %v955 = vld [vmem:[#allocation8 + $0x18] sm:$0xff]
    %v956 = vld [vmem:[#allocation8 + $0x20] sm:$0xff]
    %v957 = vld [vmem:[#allocation8 + $0x28] sm:$0xff]
    %v958 = vld [vmem:[#allocation8 + $0x30] sm:$0xff]
    %v959 = vld [vmem:[#allocation8 + $0x38] sm:$0xff]
    %v960 = vld [vmem:[#allocation8 + $0x40] sm:$0xff]
    %v961 = vld [vmem:[#allocation8 + $0x48] sm:$0xff]
    %v962 = vld [vmem:[#allocation8 + $0x50] sm:$0xff]
    %v963 = vld [vmem:[#allocation8 + $0x58] sm:$0xff]
    %v964 = vld [vmem:[#allocation8 + $0x60] sm:$0xff]
    %v965 = vld [vmem:[#allocation8 + $0x68] sm:$0xff]
    %v966 = vld [vmem:[#allocation8 + $0x70] sm:$0xff]
    %v967 = vld [vmem:[#allocation8 + $0x78] sm:$0xff]
    %v968 = vld [vmem:[#allocation8 + $0x80] sm:$0xff]
    %v969 = vld [vmem:[#allocation8 + $0x88] sm:$0xff]
    %v970 = vld [vmem:[#allocation8 + $0x90] sm:$0xff]
    %v971 = vld [vmem:[#allocation8 + $0x98] sm:$0xff]
    %v972 = vld [vmem:[#allocation8 + $0xa0] sm:$0xff]
    %v973 = vld [vmem:[#allocation8 + $0xa8] sm:$0xff]
    %v974 = vld [vmem:[#allocation8 + $0xb0] sm:$0xff]
    %v975 = vld [vmem:[#allocation8 + $0xb8] sm:$0xff]
    %v976 = vld [vmem:[#allocation8 + $0xc0] sm:$0xff]
    %v977 = vld [vmem:[#allocation8 + $0xc8] sm:$0xff]
    %v978 = vld [vmem:[#allocation8 + $0xd0] sm:$0xff]
    %v979 = vld [vmem:[#allocation8 + $0xd8] sm:$0xff]
    %v980 = vld [vmem:[#allocation8 + $0xe0] sm:$0xff]
    %v981 = vld [vmem:[#allocation8 + $0xe8] sm:$0xff]
    %v982 = vld [vmem:[#allocation8 + $0xf0] sm:$0xff]
    %v983 = vld [vmem:[#allocation8 + $0xf8] sm:$0xff]
    %v984 = vld [vmem:[#allocation8 + $0x100] sm:$0xff]
    %v985 = vld [vmem:[#allocation8 + $0x108] sm:$0xff]
    %v986 = vld [vmem:[#allocation8 + $0x110] sm:$0xff]
    %v987 = vld [vmem:[#allocation8 + $0x118] sm:$0xff]
    %v988 = vld [vmem:[#allocation8 + $0x120] sm:$0xff]
    %v989 = vld [vmem:[#allocation8 + $0x128] sm:$0xff]
    %v990 = vld [vmem:[#allocation8 + $0x130] sm:$0xff]
    %v991 = vld [vmem:[#allocation8 + $0x138] sm:$0xff]
    %v992 = vld [vmem:[#allocation8 + $0x140] sm:$0xff]
    %v993 = vld [vmem:[#allocation8 + $0x148] sm:$0xff]
    %v994 = vld [vmem:[#allocation8 + $0x150] sm:$0xff]
    %v995 = vld [vmem:[#allocation8 + $0x158] sm:$0xff]
    %v996 = vld [vmem:[#allocation8 + $0x160] sm:$0xff]
    %v997 = vld [vmem:[#allocation8 + $0x168] sm:$0xff]
    %v998 = vld [vmem:[#allocation8 + $0x170] sm:$0xff]
    %v999 = vld [vmem:[#allocation8 + $0x178] sm:$0xff]
    %v1000 = vld [vmem:[#allocation8 + $0x180] sm:$0xff]
    %v1001 = vld [vmem:[#allocation8 + $0x188] sm:$0xff]
    %v1002 = vld [vmem:[#allocation8 + $0x190] sm:$0xff]
    %v1003 = vld [vmem:[#allocation8 + $0x198] sm:$0xff]
    %v1004 = vld [vmem:[#allocation8 + $0x1a0] sm:$0xff]
    %v1005 = vld [vmem:[#allocation8 + $0x1a8] sm:$0xff]
    %v1006 = vsel %vm368, %v936, 0
    %v1008 = vsel %vm368, %v937, 0
    %v1010 = vsel %vm368, %v938, 0
    %v1012 = vsel %vm368, %v939, 0
    %1014 = vmatprep.subr.mxu0 0.0
    %1015 = vmatpush1.msra.mxu0 %v952
    %1016 = vmatprep.subr.mxu0 0.0
    %1017 = vmatpush1.msra.mxu0 %v953
    %1018 = vmatprep.subr.mxu0 0.0
    %1019 = vmatpush1.msra.mxu0 %v954
    %1020 = vmatprep.subr.mxu0 0.0
    %1021 = vmatpush1.msra.mxu0 %v955
    %1022 = vmatprep.subr.mxu0 0.0
    %1023 = vmatpush1.msra.mxu0 %v956
    %1024 = vmatprep.subr.mxu0 0.0
    %1025 = vmatpush1.msra.mxu0 %v957
    %1026 = vmatprep.subr.mxu0 0.0
    %1027 = vmatpush1.msra.mxu0 %v958
    %1028 = vmatprep.subr.mxu0 0.0
    %1029 = vmatpush1.msra.mxu0 %v959
    %1030 = vmatprep.subr.mxu0 0.0
    %1031 = vmatpush1.msra.mxu0 %v960
    %1032 = vmatprep.subr.mxu0 0.0
    %1033 = vmatpush1.msra.mxu0 %v961
    %1034 = vmatprep.subr.mxu0 0.0
    %1035 = vmatpush1.msra.mxu0 %v962
    %1036 = vmatprep.subr.mxu0 0.0
    %1037 = vmatpush1.msra.mxu0 %v963
    %1038 = vmatprep.subr.mxu0 0.0
    %1039 = vmatpush1.msra.mxu0 %v964
    %1040 = vmatprep.subr.mxu0 0.0
    %1041 = vmatpush1.msra.mxu0 %v965
    %1042 = vmatprep.subr.mxu0 0.0
    %1043 = vmatpush1.msra.mxu0 %v966
    %1044 = vmatprep.subr.mxu0 0.0
    %1045 = vmatpush1.msra.mxu0 %v967
    %1046 = vmatprep.subr.mxu0 0.0
    %1047 = vmatpush1.msra.mxu0 %v968
    %1048 = vmatprep.subr.mxu0 0.0
    %1049 = vmatpush1.msra.mxu0 %v969
    %1050 = vmatprep.subr.mxu0 0.0
    %1051 = vmatpush1.msra.mxu0 %v970
    %1052 = vmatprep.subr.mxu0 0.0
    %1053 = vmatpush1.msra.mxu0 %v971
    %1054 = vmatprep.subr.mxu0 0.0
    %1055 = vmatpush1.msra.mxu0 %v972
    %1056 = vmatprep.subr.mxu0 0.0
    %1057 = vmatpush1.msra.mxu0 %v973
    %1058 = vmatprep.subr.mxu0 0.0
    %1059 = vmatpush1.msra.mxu0 %v974
    %1060 = vmatprep.subr.mxu0 0.0
    %1061 = vmatpush1.msra.mxu0 %v975
    %1062 = vmatprep.subr.mxu0 0.0
    %1063 = vmatpush1.msra.mxu0 %v976
    %1064 = vmatprep.subr.mxu0 0.0
    %1065 = vmatpush1.msra.mxu0 %v977
    %1066 = vmatprep.subr.mxu0 0.0
    %1067 = vmatpush1.msra.mxu0 %v978
    %1068 = vmatprep.subr.mxu0 0.0
    %1069 = vmatpush1.msra.mxu0 %v979
    %1070 = vmatprep.subr.mxu0 0.0
    %1071 = vmatpush1.msra.mxu0 %v980
    %1072 = vmatprep.subr.mxu0 0.0
    %1073 = vmatpush1.msra.mxu0 %v981
    %1074 = vmatprep.subr.mxu0 0.0
    %1075 = vmatpush1.msra.mxu0 %v982
    %1076 = vmatprep.subr.mxu0 0.0
    %1077 = vmatpush1.msra.mxu0 %v983
    %1078 = vmatprep.mubr.f32.mxu0 %v944
    %1079 = vmatmul.mubr.f32.gmra.mrb[0].mxu0 %v808
    %v1080 = vpop.f32.mrb[0].mxu0
    %v1081 = vadd.f32 0.0, %v1080
    %v1082 = vpop.f32.mrb[0].mxu0
    %1083 = vmatprep.mubr.f32.mxu0 %v945
    %1084 = vmatmul.mubr.f32.gmra.mrb[0].mxu0 %v810
    %v1085 = vpop.f32.mrb[0].mxu0
    %v1086 = vadd.f32 0.0, %v1085
    %v1087 = vpop.f32.mrb[0].mxu0
    %1088 = vmatprep.mubr.f32.mxu0 %v946
    %1089 = vmatmul.mubr.f32.gmra.mrb[0].mxu0 %v812
    %v1090 = vpop.f32.mrb[0].mxu0
    %v1091 = vadd.f32 0.0, %v1090
    %v1092 = vpop.f32.mrb[0].mxu0
    %1093 = vmatprep.mubr.f32.mxu0 %v947
    %1094 = vmatmul.mubr.f32.gmra.mrb[0].mxu0 %v814
    %v1095 = vpop.f32.mrb[0].mxu0
    %v1096 = vadd.f32 0.0, %v1095
    %v1097 = vpop.f32.mrb[0].mxu0
    %1098 = vdwg.mxu0
    %1099 = vmatprep.subr.mxu0 0.0
    %1100 = vmatpush1.msra.mxu0 %v984
    %1101 = vmatprep.subr.mxu0 0.0
    %1102 = vmatpush1.msra.mxu0 %v985
    %1103 = vmatprep.subr.mxu0 0.0
    %1104 = vmatpush1.msra.mxu0 %v986
    %1105 = vmatprep.subr.mxu0 0.0
    %1106 = vmatpush1.msra.mxu0 %v987
    %1107 = vmatprep.subr.mxu0 0.0
    %1108 = vmatpush1.msra.mxu0 %v988
    %1109 = vmatprep.subr.mxu0 0.0
    %1110 = vmatpush1.msra.mxu0 %v989
    %1111 = vmatprep.subr.mxu0 0.0
    %1112 = vmatpush1.msra.mxu0 %v990
    %1113 = vmatprep.subr.mxu0 0.0
    %1114 = vmatpush1.msra.mxu0 %v991
    %1115 = vmatprep.subr.mxu0 0.0
    %1116 = vmatpush1.msra.mxu0 %v992
    %1117 = vmatprep.subr.mxu0 0.0
    %1118 = vmatpush1.msra.mxu0 %v993
    %1119 = vmatprep.subr.mxu0 0.0
    %1120 = vmatpush1.msra.mxu0 %v994
    %1121 = vmatprep.subr.mxu0 0.0
    %1122 = vmatpush1.msra.mxu0 %v995
    %1123 = vmatprep.subr.mxu0 0.0
    %1124 = vmatpush1.msra.mxu0 %v996
    %1125 = vmatprep.subr.mxu0 0.0
    %1126 = vmatpush1.msra.mxu0 %v997
    %1127 = vmatprep.subr.mxu0 0.0
    %1128 = vmatpush1.msra.mxu0 %v998
    %1129 = vmatprep.subr.mxu0 0.0
    %1130 = vmatpush1.msra.mxu0 %v999
    %1131 = vmatprep.subr.mxu0 0.0
    %1132 = vmatpush1.msra.mxu0 %v1000
    %1133 = vmatprep.subr.mxu0 0.0
    %1134 = vmatpush1.msra.mxu0 %v1001
    %1135 = vmatprep.subr.mxu0 0.0
    %1136 = vmatpush1.msra.mxu0 %v1002
    %1137 = vmatprep.subr.mxu0 0.0
    %1138 = vmatpush1.msra.mxu0 %v1003
    %1139 = vmatprep.subr.mxu0 0.0
    %1140 = vmatpush1.msra.mxu0 %v1004
    %1141 = vmatprep.subr.mxu0 0.0
    %1142 = vmatpush1.msra.mxu0 %v1005
    %1143 = vmatprep.subr.mxu0 0.0
    %1144 = vmatpush1.msra.mxu0 0.0
    %1145 = vmatprep.subr.mxu0 0.0
    %1146 = vmatpush1.msra.mxu0 0.0
    %1147 = vmatprep.subr.mxu0 0.0
    %1148 = vmatpush1.msra.mxu0 0.0
    %1149 = vmatprep.subr.mxu0 0.0
    %1150 = vmatpush1.msra.mxu0 0.0
    %1151 = vmatprep.subr.mxu0 0.0
    %1152 = vmatpush1.msra.mxu0 0.0
    %1153 = vmatprep.subr.mxu0 0.0
    %1154 = vmatpush1.msra.mxu0 0.0
    %1155 = vmatprep.subr.mxu0 0.0
    %1156 = vmatpush1.msra.mxu0 0.0
    %1157 = vmatprep.subr.mxu0 0.0
    %1158 = vmatpush1.msra.mxu0 0.0
    %1159 = vmatprep.subr.mxu0 0.0
    %1160 = vmatpush1.msra.mxu0 0.0
    %1161 = vmatprep.subr.mxu0 0.0
    %1162 = vmatpush1.msra.mxu0 0.0
    %1163 = vmatprep.mubr.f32.mxu0 %v1006
    %1164 = vmatmul.mubr.f32.gmra.mrb[0].mxu0 %v948
    %v1165 = vpop.f32.mrb[0].mxu0
    %v1166 = vadd.f32 %v1081, %v1165
    %v1167 = vpop.f32.mrb[0].mxu0
    %1168 = vmatprep.mubr.f32.mxu0 %v1008
    %1169 = vmatmul.mubr.f32.gmra.mrb[0].mxu0 %v949
    %v1170 = vpop.f32.mrb[0].mxu0
    %v1171 = vadd.f32 %v1086, %v1170
    %v1172 = vpop.f32.mrb[0].mxu0
    %1173 = vmatprep.mubr.f32.mxu0 %v1010
    %1174 = vmatmul.mubr.f32.gmra.mrb[0].mxu0 %v950
    %v1175 = vpop.f32.mrb[0].mxu0
    %v1176 = vadd.f32 %v1091, %v1175
    %v1177 = vpop.f32.mrb[0].mxu0
    %1178 = vmatprep.mubr.f32.mxu0 %v1012
    %1179 = vmatmul.mubr.f32.gmra.mrb[0].mxu0 %v951
    %v1180 = vpop.f32.mrb[0].mxu0
    %v1181 = vadd.f32 %v1096, %v1180
    %v1182 = vpop.f32.mrb[0].mxu0
    %1183 = vdwg.mxu0
    %v1184 = vadd.f32 %v1166, %v1171
    %v1185 = vadd.f32 %v1184, %v1176
    %v1186 = vadd.f32 %v1185, %v1181
    %v1187 = vrot.slane %v1186, 4
    %v1188 = vadd.f32 %v1186, %v1187
    %v1189 = vrot.slane %v1188, 2
    %v1190 = vadd.f32 %v1188, %v1189
    %v1191 = vrot.slane %v1190, 1
    %v1192 = vadd.f32 %v1190, %v1191
    %v1193 = vld [vmem:[#allocation9] sm:$0xff]
    %v1194 = vld [vmem:[#allocation9 + $0x8] sm:$0xff]
    %v1195 = vld [vmem:[#allocation9 + $0x10] sm:$0xff]
    %v1196 = vld [vmem:[#allocation9 + $0x18] sm:$0xff]
    %v1197 = vld [vmem:[#allocation9 + $0x20] sm:$0xff]
    %v1198 = vld [vmem:[#allocation9 + $0x28] sm:$0xff]
    %v1199 = vld [vmem:[#allocation9 + $0x30] sm:$0xff]
    %v1200 = vld [vmem:[#allocation9 + $0x38] sm:$0xff]
    %v1201 = vld [vmem:[#allocation9 + $0x40] sm:$0xff]
    %v1202 = vld [vmem:[#allocation9 + $0x48] sm:$0xff]
    %v1203 = vld [vmem:[#allocation9 + $0x50] sm:$0xff]
    %v1204 = vld [vmem:[#allocation9 + $0x58] sm:$0xff]
    %v1205 = vld [vmem:[#allocation9 + $0x60] sm:$0xff]
    %v1206 = vld [vmem:[#allocation9 + $0x68] sm:$0xff]
    %v1207 = vld [vmem:[#allocation9 + $0x70] sm:$0xff]
    %v1208 = vld [vmem:[#allocation9 + $0x78] sm:$0xff]
    %1209 = vmatprep.subr.mxu0 0.0
    %1210 = vmatpush1.msra.mxu0 %v1193
    %1211 = vmatprep.subr.mxu0 0.0
    %1212 = vmatpush1.msra.mxu0 %v1194
    %1213 = vmatprep.subr.mxu0 0.0
    %1214 = vmatpush1.msra.mxu0 %v1195
    %1215 = vmatprep.subr.mxu0 0.0
    %1216 = vmatpush1.msra.mxu0 %v1196
    %1217 = vmatprep.subr.mxu0 0.0
    %1218 = vmatpush1.msra.mxu0 %v1197
    %1219 = vmatprep.subr.mxu0 0.0
    %1220 = vmatpush1.msra.mxu0 %v1198
    %1221 = vmatprep.subr.mxu0 0.0
    %1222 = vmatpush1.msra.mxu0 %v1199
    %1223 = vmatprep.subr.mxu0 0.0
    %1224 = vmatpush1.msra.mxu0 %v1200
    %1225 = vmatprep.subr.mxu0 0.0
    %1226 = vmatpush1.msra.mxu0 %v1201
    %1227 = vmatprep.subr.mxu0 0.0
    %1228 = vmatpush1.msra.mxu0 %v1202
    %1229 = vmatprep.subr.mxu0 0.0
    %1230 = vmatpush1.msra.mxu0 %v1203
    %1231 = vmatprep.subr.mxu0 0.0
    %1232 = vmatpush1.msra.mxu0 %v1204
    %1233 = vmatprep.subr.mxu0 0.0
    %1234 = vmatpush1.msra.mxu0 %v1205
    %1235 = vmatprep.subr.mxu0 0.0
    %1236 = vmatpush1.msra.mxu0 %v1206
    %1237 = vmatprep.subr.mxu0 0.0
    %1238 = vmatpush1.msra.mxu0 %v1207
    %1239 = vmatprep.subr.mxu0 0.0
    %1240 = vmatpush1.msra.mxu0 %v1208
    %1241 = vmatprep.subr.mxu0 0.0
    %1242 = vmatpush1.msra.mxu0 0.0
    %1243 = vmatprep.subr.mxu0 0.0
    %1244 = vmatpush1.msra.mxu0 0.0
    %1245 = vmatprep.subr.mxu0 0.0
    %1246 = vmatpush1.msra.mxu0 0.0
    %1247 = vmatprep.subr.mxu0 0.0
    %1248 = vmatpush1.msra.mxu0 0.0
    %1249 = vmatprep.subr.mxu0 0.0
    %1250 = vmatpush1.msra.mxu0 0.0
    %1251 = vmatprep.subr.mxu0 0.0
    %1252 = vmatpush1.msra.mxu0 0.0
    %1253 = vmatprep.subr.mxu0 0.0
    %1254 = vmatpush1.msra.mxu0 0.0
    %1255 = vmatprep.subr.mxu0 0.0
    %1256 = vmatpush1.msra.mxu0 0.0
    %1257 = vmatprep.subr.mxu0 0.0
    %1258 = vmatpush1.msra.mxu0 0.0
    %1259 = vmatprep.subr.mxu0 0.0
    %1260 = vmatpush1.msra.mxu0 0.0
    %1261 = vmatprep.subr.mxu0 0.0
    %1262 = vmatpush1.msra.mxu0 0.0
    %1263 = vmatprep.subr.mxu0 0.0
    %1264 = vmatpush1.msra.mxu0 0.0
    %1265 = vmatprep.subr.mxu0 0.0
    %1266 = vmatpush1.msra.mxu0 0.0
    %1267 = vmatprep.subr.mxu0 0.0
    %1268 = vmatpush1.msra.mxu0 0.0
    %1269 = vmatprep.subr.mxu0 0.0
    %1270 = vmatpush1.msra.mxu0 0.0
    %1271 = vmatprep.subr.mxu0 0.0
    %1272 = vmatpush1.msra.mxu0 0.0
    %1273 = vmatprep.mubr.f32.mxu0 0.0
    %1274 = vmatmul.mubr.f32.gmra.mrb[0].mxu0 %v1192
    %v1275 = vpop.f32.mrb[0].mxu0
    %v1276 = vadd.f32 0.0, %v1275
    %v1277 = vpop.f32.mrb[0].mxu0
    %1278 = vdwg.mxu0
    %v1279 = vlaneseq
    %v1280 = vshrl.u32 %v1279, 7
    %v1281 = vsub.s32 0, %v1280
    %v1282 = vrot.slane %v1276, %v1281
    %v1283 = vsub.f32 %v1166, %v1282
    %v1284 = vsub.f32 %v1171, %v1282
    %v1285 = vsub.f32 %v1176, %v1282
    %v1286 = vsub.f32 %v1181, %v1282
    %v1287 = vmul.f32 %v1283, %v1283
    %v1288 = vmul.f32 %v1284, %v1284
    %v1289 = vmul.f32 %v1285, %v1285
    %v1290 = vmul.f32 %v1286, %v1286
    %v1291 = vadd.f32 %v1287, %v1288
    %v1292 = vadd.f32 %v1291, %v1289
    %v1293 = vadd.f32 %v1292, %v1290
    %v1294 = vrot.slane %v1293, 4
    %v1295 = vadd.f32 %v1293, %v1294
    %v1296 = vrot.slane %v1295, 2
    %v1297 = vadd.f32 %v1295, %v1296
    %v1298 = vrot.slane %v1297, 1
    %v1299 = vadd.f32 %v1297, %v1298
    %1300 = vmatprep.subr.mxu0 0.0
    %1301 = vmatpush1.msra.mxu0 %v1193
    %1302 = vmatprep.subr.mxu0 0.0
    %1303 = vmatpush1.msra.mxu0 %v1194
    %1304 = vmatprep.subr.mxu0 0.0
    %1305 = vmatpush1.msra.mxu0 %v1195
    %1306 = vmatprep.subr.mxu0 0.0
    %1307 = vmatpush1.msra.mxu0 %v1196
    %1308 = vmatprep.subr.mxu0 0.0
    %1309 = vmatpush1.msra.mxu0 %v1197
    %1310 = vmatprep.subr.mxu0 0.0
    %1311 = vmatpush1.msra.mxu0 %v1198
    %1312 = vmatprep.subr.mxu0 0.0
    %1313 = vmatpush1.msra.mxu0 %v1199
    %1314 = vmatprep.subr.mxu0 0.0
    %1315 = vmatpush1.msra.mxu0 %v1200
    %1316 = vmatprep.subr.mxu0 0.0
    %1317 = vmatpush1.msra.mxu0 %v1201
    %1318 = vmatprep.subr.mxu0 0.0
    %1319 = vmatpush1.msra.mxu0 %v1202
    %1320 = vmatprep.subr.mxu0 0.0
    %1321 = vmatpush1.msra.mxu0 %v1203
    %1322 = vmatprep.subr.mxu0 0.0
    %1323 = vmatpush1.msra.mxu0 %v1204
    %1324 = vmatprep.subr.mxu0 0.0
    %1325 = vmatpush1.msra.mxu0 %v1205
    %1326 = vmatprep.subr.mxu0 0.0
    %1327 = vmatpush1.msra.mxu0 %v1206
    %1328 = vmatprep.subr.mxu0 0.0
    %1329 = vmatpush1.msra.mxu0 %v1207
    %1330 = vmatprep.subr.mxu0 0.0
    %1331 = vmatpush1.msra.mxu0 %v1208
    %1332 = vmatprep.subr.mxu0 0.0
    %1333 = vmatpush1.msra.mxu0 0.0
    %1334 = vmatprep.subr.mxu0 0.0
    %1335 = vmatpush1.msra.mxu0 0.0
    %1336 = vmatprep.subr.mxu0 0.0
    %1337 = vmatpush1.msra.mxu0 0.0
    %1338 = vmatprep.subr.mxu0 0.0
    %1339 = vmatpush1.msra.mxu0 0.0
    %1340 = vmatprep.subr.mxu0 0.0
    %1341 = vmatpush1.msra.mxu0 0.0
    %1342 = vmatprep.subr.mxu0 0.0
    %1343 = vmatpush1.msra.mxu0 0.0
    %1344 = vmatprep.subr.mxu0 0.0
    %1345 = vmatpush1.msra.mxu0 0.0
    %1346 = vmatprep.subr.mxu0 0.0
    %1347 = vmatpush1.msra.mxu0 0.0
    %1348 = vmatprep.subr.mxu0 0.0
    %1349 = vmatpush1.msra.mxu0 0.0
    %1350 = vmatprep.subr.mxu0 0.0
    %1351 = vmatpush1.msra.mxu0 0.0
    %1352 = vmatprep.subr.mxu0 0.0
    %1353 = vmatpush1.msra.mxu0 0.0
    %1354 = vmatprep.subr.mxu0 0.0
    %1355 = vmatpush1.msra.mxu0 0.0
    %1356 = vmatprep.subr.mxu0 0.0
    %1357 = vmatpush1.msra.mxu0 0.0
    %1358 = vmatprep.subr.mxu0 0.0
    %1359 = vmatpush1.msra.mxu0 0.0
    %1360 = vmatprep.subr.mxu0 0.0
    %1361 = vmatpush1.msra.mxu0 0.0
    %1362 = vmatprep.subr.mxu0 0.0
    %1363 = vmatpush1.msra.mxu0 0.0
    %1364 = vmatprep.mubr.f32.mxu0 0.0
    %1365 = vmatmul.mubr.f32.gmra.mrb[0].mxu0 %v1299
    %v1366 = vpop.f32.mrb[0].mxu0
    %v1367 = vadd.f32 1e-05, %v1366
    %v1368 = vpop.f32.mrb[0].mxu0
    %1369 = vdwg.mxu0
    %v1370 = vrsqrt.pop %v1367
    %v1371 = vlaneseq
    %v1372 = vshrl.u32 %v1371, 7
    %v1373 = vsub.s32 0, %v1372
    %v1374 = vrot.slane %v1370, %v1373
    %v1375 = vmul.f32 %v1283, %v1374
    %v1376 = vmul.f32 %v1284, %v1374
    %v1377 = vmul.f32 %v1285, %v1374
    %v1378 = vmul.f32 %v1286, %v1374
    %v1379 = vld [vmem:[%s5] sm:$0x1]
    %v1381 = vlaneseq
    %v1382 = vshrl.u32 %v1381, 7
    %v1383 = vsub.s32 0, %v1382
    %v1384 = vrot.slane %v1379, %v1383
    %v1386 = vmul.f32 %v1375, %v1384
    %v1387 = vmul.f32 %v1376, %v1384
    %v1388 = vmul.f32 %v1377, %v1384
    %v1389 = vmul.f32 %v1378, %v1384
    %v1390 = vld [vmem:[%s6] sm:$0x1]
    %v1392 = vlaneseq
    %v1393 = vshrl.u32 %v1392, 7
    %v1394 = vsub.s32 0, %v1393
    %v1395 = vrot.slane %v1390, %v1394
    %v1397 = vadd.f32 %v1386, %v1395
    %v1398 = vadd.f32 %v1387, %v1395
    %v1399 = vadd.f32 %v1388, %v1395
    %v1400 = vadd.f32 %v1389, %v1395
    %v1401 = vadd.f32 %v1397, %v116
    %v1402 = vadd.f32 %v1398, %v117
    %v1403 = vadd.f32 %v1399, %v118
    %v1404 = vadd.f32 %v1400, %v119
    %1405 = vst [vmem:[#allocation11] sm:$0xff] %v1401
    %1406 = vst [vmem:[#allocation11 + $0x8] sm:$0xff] %v1402
    %1407 = vst [vmem:[#allocation11 + $0x10] sm:$0xff] %v1403
    %1408 = vst [vmem:[#allocation11 + $0x18] sm:$0xff] %v1404
    // Predicated region
    $region50: #{tpu_custom_call.1} parent=1 // pred_check
      _
    $region51: #{tpu_custom_call.1} parent=1 // pred_check_branch
      %1410 = sbr.rel (0) target = $region53
    $region52: #{tpu_custom_call.1} parent=1 // pred_region
      %s1412 = ssub.s32 512, 512
      %1413 = vsyncadd [#allocation5], %s1412
      %s1414 = sshll.u32 [#allocation11], 4
      %s1415 = int_to_ptr.vmem [resolvable:$true] %s1414
      %1420 = dma.vmem_to_hbm [thread:$0]  %s1415, 512, %s8, [#allocation5], 128, 128, 8
    $region53: #{tpu_custom_call.1} parent=1 // pred_fallthru
      _
    // Predicated region
    $region54: #{tpu_custom_call.1} parent=1 // pred_check
      _
    $region55: #{tpu_custom_call.1} parent=1 // pred_check_branch
      %1422 = sbr.rel (0) target = $region57
    $region56: #{tpu_custom_call.1} parent=1 // pred_region
      %1423 = dma.done [#allocation5], 512
    $region57: #{tpu_custom_call.1} parent=1 // pred_fallthru
      _
    %1424 = vsyncpa [#allocation4], 1
    %1425 = vsyncpa [#allocation7], 1
    %1426 = vsyncpa [#allocation10], 1
    %1427 = vsyncpa [#allocation5], 1

</llo_original>
